<compile_context>
chip_gen: v7x
topology: tpu7x:2x2x1
jax: 0.10.0
libtpu: 0.0.40
codegen_flags: <defaults>
</compile_context>

<pallas_src>
import functools

import jax
import jax.numpy as jnp
from jax import lax
from jax.experimental import pallas as pl
from jax.experimental.pallas import tpu as pltpu


def _knn_pair_scatter_kernel(x0_ref, x1_ref, p0_ref, pos_ref,
                             sims_ref, nacc_ref, *, dist_metric):
    """One pair tile: per-pair similarity + dense scatter of negatives onto nodes."""
    t = pl.program_id(1)                       # tile index within this shard
    n_pad = nacc_ref.shape[-1]

    @pl.when(t == 0)
    def _init():                               # new shard -> fresh accumulator
        nacc_ref[...] = jnp.zeros_like(nacc_ref)

    x0 = x0_ref[...].astype(jnp.float32)       # [TP, D]
    x1 = x1_ref[...].astype(jnp.float32)       # [TP, D]

    if dist_metric == "cosine":
        # x is pre-normalized per node in the wrapper, so cosine similarity is
        # just a lane reduction of the elementwise product.
        sim = jnp.sum(x0 * x1, axis=-1, keepdims=True)            # [TP, 1]
    elif dist_metric == "l2_rbf":
        d = x0 - x1
        l2 = jnp.sqrt(jnp.sum(d * d, axis=-1, keepdims=True))
        sim = jnp.exp(-l2 / (2.0 * 0.75 ** 2))
    elif dist_metric == "l2":
        d = x0 - x1
        sim = jnp.sqrt(jnp.sum(d * d, axis=-1, keepdims=True))
    else:
        raise NotImplementedError(
            f"Distance metric {dist_metric} not implemented.")

    sims_ref[...] = sim                                            # cached sim

    # Dense scatter of (neg sim sum, neg count) onto nodes, nodes on lanes.
    negf = 1.0 - pos_ref[...]                                      # [TP, 1]
    node_row = lax.broadcasted_iota(jnp.int32, (1, n_pad), 1)      # [1, N_pad]
    match = p0_ref[...] == node_row                                # [TP, N_pad]
    psum = jnp.sum(jnp.where(match, sim * negf, 0.0),
                   axis=0, keepdims=True)                          # [1, N_pad]
    pcnt = jnp.sum(jnp.where(match, negf, 0.0),
                   axis=0, keepdims=True)                          # [1, N_pad]
    nacc_ref[...] += jnp.concatenate([psum, pcnt], axis=0)[None, :, :]


def knn_triplet_loss(x, edge_index, cluster_ids, recons, pts, *, margin,
                     dist_metric="cosine", pt_thres=0.9, tile_p=512,
                     n_shards=2):
    """Forward pass of knnTripletLoss; heavy per-pair work runs in Pallas."""
    N, D = x.shape
    p0 = edge_index[0].astype(jnp.int32)
    p1 = edge_index[1].astype(jnp.int32)
    P = int(p0.shape[0])

    # --- masks (JAX glue; mirrors the PyTorch forward) ------------------------
    valid = (recons != 0) & (pts > pt_thres)
    pos = (cluster_ids[p0] == cluster_ids[p1]) & valid[p0] & valid[p1]
    posf = pos.astype(jnp.float32)

    # --- pre-normalize once per node for the cosine metric --------------------
    xf = x.astype(jnp.float32)
    if dist_metric == "cosine":
        nrm = jnp.sqrt(jnp.sum(xf * xf, axis=-1, keepdims=True))
        xg = xf / jnp.maximum(nrm, 1e-8)
    else:
        xg = xf

    # --- gather pair endpoints (data-dependent; stays in XLA glue) ------------
    x0 = xg[p0]                                                    # [P, D]
    x1 = xg[p1]                                                    # [P, D]

    # --- pad pair axis to a multiple of (n_shards * tile_p); pad nodes to 128 -
    tile_p = max(128, (int(tile_p) // 128) * 128)
    n_shards = max(1, int(n_shards))
    chunk = tile_p * n_shards
    p_pad = ((P + chunk - 1) // chunk) * chunk
    pad = p_pad - P
    n_pad = ((N + 127) // 128) * 128
    sentinel = n_pad                        # out of range of node ids [0, n_pad)
    if pad:
        x0 = jnp.pad(x0, ((0, pad), (0, 0)))
        x1 = jnp.pad(x1, ((0, pad), (0, 0)))
        p0p = jnp.pad(p0, (0, pad), constant_values=sentinel)
        posp = jnp.pad(posf, (0, pad))
    else:
        p0p, posp = p0, posf
    p0_col = p0p.reshape(p_pad, 1)
    pos_col = posp.reshape(p_pad, 1)

    tiles_per_shard = p_pad // chunk

    def pair_map(s, t):
        return (s * tiles_per_shard + t, 0)

    kernel = functools.partial(_knn_pair_scatter_kernel,
                               dist_metric=dist_metric)

    grid_spec = pltpu.PrefetchScalarGridSpec(
        num_scalar_prefetch=0,
        grid=(n_shards, tiles_per_shard),
        in_specs=[
            pl.BlockSpec((tile_p, D), pair_map),     # x0 (normalized)
            pl.BlockSpec((tile_p, D), pair_map),     # x1 (normalized)
            pl.BlockSpec((tile_p, 1), pair_map),     # anchor ids p0
            pl.BlockSpec((tile_p, 1), pair_map),     # positive-pair mask
        ],
        out_specs=[
            pl.BlockSpec((tile_p, 1), pair_map),                   # per-pair sim
            pl.BlockSpec((1, 2, n_pad), lambda s, t: (s, 0, 0)),   # per-shard nacc
        ],
    )

    sims, nacc = pl.pallas_call(
        kernel,
        out_shape=(jax.ShapeDtypeStruct((p_pad, 1), jnp.float32),
                   jax.ShapeDtypeStruct((n_shards, 2, n_pad), jnp.float32)),
        grid_spec=grid_spec,
        compiler_params=pltpu.CompilerParams(
            dimension_semantics=("parallel", "arbitrary"),
            vmem_limit_bytes=32 * 1024 * 1024),
    )(x0, x1, p0_col, pos_col)

    # --- finalize scatter_mean, gather per anchor, hinge, mean (XLA glue) -----
    nacc = jnp.sum(nacc, axis=0)                                   # [2, N_pad]
    nsum = nacc[0, :N]
    ncnt = nacc[1, :N]
    neg_mean = jnp.maximum(nsum / jnp.maximum(ncnt, 1.0), 0.0)     # clamp(min=0)
    sim = sims[:P, 0]
    hinge = jnp.maximum(sim - neg_mean[p0] + margin, 0.0)
    num_pos = jnp.sum(posf)
    loss = jnp.sum(hinge * posf) / jnp.maximum(num_pos, 1.0)
    # TODO(synk): PyTorch's .mean() over zero positive pairs yields NaN; we
    # return 0.0 in that degenerate case instead.
    return jnp.where(num_pos > 0, loss, 0.0)


def knn_triplet_reference(x, edge_index, cluster_ids, recons, pts, *, margin,
                          dist_metric="cosine", pt_thres=0.9):
    """Pure-JAX mirror of the PyTorch forward (segment-sum scatter_mean)."""
    p0, p1 = edge_index[0], edge_index[1]
    N = x.shape[0]
    valid = (recons != 0) & (pts > pt_thres)
    pos = (cluster_ids[p0] == cluster_ids[p1]) & valid[p0] & valid[p1]
    neg = ~pos
    x0 = x[p0].astype(jnp.float32)
    x1 = x[p1].astype(jnp.float32)
    if dist_metric == "cosine":
        eps = 1e-8
        sim = jnp.sum(x0 * x1, axis=-1) / (
            jnp.maximum(jnp.linalg.norm(x0, axis=-1), eps) *
            jnp.maximum(jnp.linalg.norm(x1, axis=-1), eps))
    elif dist_metric == "l2_rbf":
        sim = jnp.exp(-jnp.linalg.norm(x0 - x1, axis=-1) / (2 * 0.75 ** 2))
    elif dist_metric == "l2":
        sim = jnp.linalg.norm(x0 - x1, axis=-1)
    else:
        raise NotImplementedError(dist_metric)
    negf = neg.astype(jnp.float32)
    nsum = jnp.zeros((N,), jnp.float32).at[p0].add(sim * negf)
    ncnt = jnp.zeros((N,), jnp.float32).at[p0].add(negf)
    neg_mean = jnp.maximum(nsum / jnp.maximum(ncnt, 1.0), 0.0)
    loss_pp = jnp.maximum(sim - neg_mean[p0] + margin, 0.0)
    posf = pos.astype(jnp.float32)
    return jnp.sum(loss_pp * posf) / jnp.maximum(jnp.sum(posf), 1.0)


if __name__ == "__main__":
    key = jax.random.PRNGKey(0)
    N, D, P, C = 64, 32, 2048, 5
    k1, k2, k3, k4, k5 = jax.random.split(key, 5)

    x = jax.random.normal(k1, (N, D), dtype=jnp.float32)
    cluster_ids = jax.random.randint(k2, (N,), 0, C, dtype=jnp.int32)
    edge_index = jax.random.randint(k3, (2, P), 0, N, dtype=jnp.int32)
    pts = jax.random.uniform(k4, (N,), dtype=jnp.float32, minval=0.5, maxval=2.0)
    recons = (jax.random.uniform(k5, (N,)) > 0.1).astype(jnp.int32)

    loss = knn_triplet_loss(x, edge_index, cluster_ids, recons, pts,
                            margin=0.5, dist_metric="cosine",
                            tile_p=512, n_shards=2)
    loss = jax.block_until_ready(loss)

    ref = knn_triplet_reference(x, edge_index, cluster_ids, recons, pts,
                                margin=0.5, dist_metric="cosine")
    assert jnp.allclose(loss, ref, rtol=5e-4, atol=1e-5), (loss, ref)
    print("KERNEL_OK")
</pallas_src>

<mosaic_0001>
module attributes {stable_mosaic.version = 11 : i64} {
  func.func @_knn_pair_scatter_kernel(%arg0: i32, %arg1: i32, %arg2: memref<512x32xf32, #tpu.memory_space<vmem>>, %arg3: memref<512x32xf32, #tpu.memory_space<vmem>>, %arg4: memref<512x1xi32, #tpu.memory_space<vmem>>, %arg5: memref<512x1xf32, #tpu.memory_space<vmem>>, %arg6: memref<512x1xf32, #tpu.memory_space<vmem>>, %arg7: memref<1x2x128xf32, #tpu.memory_space<vmem>>) attributes {dimension_semantics = [#tpu.dimension_semantics<parallel>, #tpu.dimension_semantics<arbitrary>], iteration_bounds = array<i64: 2, 2>, scalar_prefetch = 0 : i64, scratch_operands = 0 : i64, tpu.core_type = #tpu.core_type<tc>, window_params = [{transform_indices = @transform_0, window_bounds = array<i64: 512, 32>}, {transform_indices = @transform_1, window_bounds = array<i64: 512, 32>}, {transform_indices = @transform_2, window_bounds = array<i64: 512, 1>}, {transform_indices = @transform_3, window_bounds = array<i64: 512, 1>}, {transform_indices = @transform_4, window_bounds = array<i64: 512, 1>}, {transform_indices = @transform_5, window_bounds = array<i64: 1, 2, 128>}]} {
    %c0_i32 = arith.constant 0 : i32
    %0 = arith.cmpi eq, %arg1, %c0_i32 : i32
    %1 = arith.extui %0 : i1 to i32
    %c0_i32_0 = arith.constant 0 : i32
    %2 = arith.cmpi ne, %1, %c0_i32_0 : i32
    scf.if %2 {
      %cst_21 = arith.constant 0.000000e+00 : f32
      %35 = vector.broadcast %cst_21 : f32 to vector<1x2x128xf32>
      %c0_22 = arith.constant 0 : index
      %c0_23 = arith.constant 0 : index
      %c0_24 = arith.constant 0 : index
      %36 = vector.load %arg7[%c0_22, %c0_23, %c0_24] : memref<1x2x128xf32, #tpu.memory_space<vmem>>, vector<1x2x128xf32>
      tpu.vector_store %arg7[%c0_22, %c0_23, %c0_24], %35 {strides = array<i32>} : memref<1x2x128xf32, #tpu.memory_space<vmem>>, vector<1x2x128xf32>,
    } else {
    }
    %c0 = arith.constant 0 : index
    %c0_1 = arith.constant 0 : index
    %3 = vector.load %arg2[%c0, %c0_1] : memref<512x32xf32, #tpu.memory_space<vmem>>, vector<512x32xf32>
    %c0_2 = arith.constant 0 : index
    %c0_3 = arith.constant 0 : index
    %4 = vector.load %arg3[%c0_2, %c0_3] : memref<512x32xf32, #tpu.memory_space<vmem>>, vector<512x32xf32>
    %5 = arith.mulf %3, %4 : vector<512x32xf32>
    %cst = arith.constant dense<0.000000e+00> : vector<512xf32>
    %6 = vector.multi_reduction <add>, %5, %cst [1] : vector<512x32xf32> to vector<512xf32>
    %7 = vector.shape_cast %6 : vector<512xf32> to vector<512x1xf32>
    %c0_4 = arith.constant 0 : index
    %c0_5 = arith.constant 0 : index
    %8 = vector.load %arg6[%c0_4, %c0_5] : memref<512x1xf32, #tpu.memory_space<vmem>>, vector<512x1xf32>
    tpu.vector_store %arg6[%c0_4, %c0_5], %7 {strides = array<i32>} : memref<512x1xf32, #tpu.memory_space<vmem>>, vector<512x1xf32>,
    %c0_6 = arith.constant 0 : index
    %c0_7 = arith.constant 0 : index
    %9 = vector.load %arg5[%c0_6, %c0_7] : memref<512x1xf32, #tpu.memory_space<vmem>>, vector<512x1xf32>
    %cst_8 = arith.constant 1.000000e+00 : f32
    %10 = vector.broadcast %cst_8 : f32 to vector<512x1xf32>
    %11 = arith.subf %10, %9 : vector<512x1xf32>
    %12 = tpu.iota {dimensions = array<i32: 1>} : vector<1x128xi32>
    %c0_9 = arith.constant 0 : index
    %c0_10 = arith.constant 0 : index
    %13 = vector.load %arg4[%c0_9, %c0_10] : memref<512x1xi32, #tpu.memory_space<vmem>>, vector<512x1xi32>
    %14 = vector.broadcast %13 : vector<512x1xi32> to vector<512x128xi32>
    %15 = vector.broadcast %12 : vector<1x128xi32> to vector<512x128xi32>
    %16 = arith.cmpi eq, %14, %15 : vector<512x128xi32>
    %17 = arith.mulf %7, %11 : vector<512x1xf32>
    %cst_11 = arith.constant 0.000000e+00 : f32
    %18 = vector.shape_cast %17 : vector<512x1xf32> to vector<512x1xf32>
    %19 = vector.broadcast %18 : vector<512x1xf32> to vector<512x128xf32>
    %20 = vector.broadcast %cst_11 : f32 to vector<512x128xf32>
    %21 = arith.select %16, %19, %20 : vector<512x128xi1>, vector<512x128xf32>
    %cst_12 = arith.constant dense<0.000000e+00> : vector<128xf32>
    %22 = vector.multi_reduction <add>, %21, %cst_12 [0] : vector<512x128xf32> to vector<128xf32>
    %23 = vector.shape_cast %22 : vector<128xf32> to vector<1x128xf32>
    %cst_13 = arith.constant 0.000000e+00 : f32
    %24 = vector.shape_cast %11 : vector<512x1xf32> to vector<512x1xf32>
    %25 = vector.broadcast %24 : vector<512x1xf32> to vector<512x128xf32>
    %26 = vector.broadcast %cst_13 : f32 to vector<512x128xf32>
    %27 = arith.select %16, %25, %26 : vector<512x128xi1>, vector<512x128xf32>
    %cst_14 = arith.constant dense<0.000000e+00> : vector<128xf32>
    %28 = vector.multi_reduction <add>, %27, %cst_14 [0] : vector<512x128xf32> to vector<128xf32>
    %29 = vector.shape_cast %28 : vector<128xf32> to vector<1x128xf32>
    %c0_15 = arith.constant 0 : index
    %c0_16 = arith.constant 0 : index
    %c0_17 = arith.constant 0 : index
    %30 = vector.load %arg7[%c0_15, %c0_16, %c0_17] : memref<1x2x128xf32, #tpu.memory_space<vmem>>, vector<1x2x128xf32>
    %31 = tpu.concatenate %23, %29 in 0 : vector<1x128xf32>, vector<1x128xf32> -> vector<2x128xf32>
    %32 = vector.shape_cast %31 : vector<2x128xf32> to vector<1x2x128xf32>
    %33 = arith.addf %30, %32 : vector<1x2x128xf32>
    %c0_18 = arith.constant 0 : index
    %c0_19 = arith.constant 0 : index
    %c0_20 = arith.constant 0 : index
    %34 = vector.load %arg7[%c0_18, %c0_19, %c0_20] : memref<1x2x128xf32, #tpu.memory_space<vmem>>, vector<1x2x128xf32>
    tpu.vector_store %arg7[%c0_18, %c0_19, %c0_20], %33 {strides = array<i32>} : memref<1x2x128xf32, #tpu.memory_space<vmem>>, vector<1x2x128xf32>,
    return
  }
  func.func @transform_0(%arg0: i32, %arg1: i32) -> (i32, i32) {
    %c2_i32 = arith.constant 2 : i32
    %0 = arith.muli %arg0, %c2_i32 : i32
    %1 = arith.addi %0, %arg1 : i32
    %c0_i32 = arith.constant 0 : i32
    %c0_i32_0 = arith.constant 0 : i32
    return %1, %c0_i32 : i32, i32
  }
  func.func @transform_1(%arg0: i32, %arg1: i32) -> (i32, i32) {
    %c2_i32 = arith.constant 2 : i32
    %0 = arith.muli %arg0, %c2_i32 : i32
    %1 = arith.addi %0, %arg1 : i32
    %c0_i32 = arith.constant 0 : i32
    %c0_i32_0 = arith.constant 0 : i32
    return %1, %c0_i32 : i32, i32
  }
  func.func @transform_2(%arg0: i32, %arg1: i32) -> (i32, i32) {
    %c2_i32 = arith.constant 2 : i32
    %0 = arith.muli %arg0, %c2_i32 : i32
    %1 = arith.addi %0, %arg1 : i32
    %c0_i32 = arith.constant 0 : i32
    %c0_i32_0 = arith.constant 0 : i32
    return %1, %c0_i32 : i32, i32
  }
  func.func @transform_3(%arg0: i32, %arg1: i32) -> (i32, i32) {
    %c2_i32 = arith.constant 2 : i32
    %0 = arith.muli %arg0, %c2_i32 : i32
    %1 = arith.addi %0, %arg1 : i32
    %c0_i32 = arith.constant 0 : i32
    %c0_i32_0 = arith.constant 0 : i32
    return %1, %c0_i32 : i32, i32
  }
  func.func @transform_4(%arg0: i32, %arg1: i32) -> (i32, i32) {
    %c2_i32 = arith.constant 2 : i32
    %0 = arith.muli %arg0, %c2_i32 : i32
    %1 = arith.addi %0, %arg1 : i32
    %c0_i32 = arith.constant 0 : i32
    %c0_i32_0 = arith.constant 0 : i32
    return %1, %c0_i32 : i32, i32
  }
  func.func @transform_5(%arg0: i32, %arg1: i32) -> (i32, i32, i32) {
    %c0_i32 = arith.constant 0 : i32
    %c0_i32_0 = arith.constant 0 : i32
    %c0_i32_1 = arith.constant 0 : i32
    return %arg0, %c0_i32, %c0_i32_0 : i32, i32, i32
  }
}

</mosaic_0001>

<llo_original>
// kernel: tpu_custom_call.1
$region0: #{tpu_custom_call.1}
  #allocation0 [shape = 'u32[]', space=smem, size = 0x4, offset = 0x4, fixed_abs, tag = 'smem constant byte address 0x4 - core index']
  #allocation1 [shape = 'u32[144,128]{1,0:T(1,128)}', space=vmem, size = 0x12000, scoped, tag = 'internal scratch']
  %s0 = inlined_call_operand.vmem [shape: f32[2048,32], index: 0, kind: input, shape index: {}]
  %s1 = inlined_call_operand.vmem [shape: f32[2048,32], index: 1, kind: input, shape index: {}]
  %s2 = inlined_call_operand.vmem [shape: s32[2048,1], index: 2, kind: input, shape index: {}]
  %s3 = inlined_call_operand.vmem [shape: f32[2048,1], index: 3, kind: input, shape index: {}]
  %s4 = inlined_call_operand.vmem [shape: f32[2048,1], index: 4, kind: output, shape index: {0}]
  %s5 = inlined_call_operand.hbm [shape: f32[2,2,128], index: 5, kind: output, shape index: {1}]
  %6 = xla_tuple %s4, %s5
  %s7 = sld [smem:[#allocation0]]
  $region61: #{tpu_custom_call.1} parent=0
    _
  %s9 = ssub.s32 1, %s7
  %s10 = scalar_select 0, %s9, %s7
  $region1: #{tpu_custom_call.1} parent=0
    #allocation2 [shape = 'u8[2048]{0}', space=vmem, size = 0x800, scoped, tag = 'output window, operand 1']
    #allocation3 [shape = 's32[2]{0}', space=sflag, size = 0x8, scoped, tag = 'scoped memory for tpu_custom_call.1']
    %11 = vsyncpa [#allocation3], 0
    %s12 = scalar_lea.sflag [#allocation3], 1
    %13 = vsyncpa %s12, 0
    loop: start=0, step=1, limit=6
    $region2: #{tpu_custom_call.1} parent=1 // loop_pre_header
      _
    $region3: #{tpu_custom_call.1} parent=1 // loop_header
      %s15 = sphi 0, %s19
      %p16 = scmp.ge.s32.totalorder %s15, 6
      %s22 = sphi 0, %s34
      %s23 = sphi 0, %s30
      %s24 = sphi 0, %s22
      %s25 = sphi 0, %s23
      %s26 = sphi 0, %s24
      %s27 = sphi 0, %s25
      %s41 = sphi 0, %s43
      %s44 = sphi 0, %s41
      %s45 = sphi 0, %s44
      %s61 = sphi 0, %s45
      %s71 = sphi 0, %s73
      %s74 = sphi 0, %s71
      %s75 = sphi 0, %s74
      %s91 = sphi 0, %s75
      %s101 = sphi 0, %s103
      %s104 = sphi 0, %s101
      %s105 = sphi 0, %s104
      %s121 = sphi 0, %s105
      %s131 = sphi 0, %s133
      %s134 = sphi 0, %s131
      %s135 = sphi 0, %s134
      %s151 = sphi 0, %s135
      %s161 = sphi 0, %s163
      %s164 = sphi 0, %s161
      %s165 = sphi 0, %s164
      %s181 = sphi 0, %s165
      %s187 = sphi 0, %s189
      %s190 = sphi 0, %s187
      %s191 = sphi 0, %s190
      %s207 = sphi 0, %s191
    $region4: #{tpu_custom_call.1} parent=1 // loop_header_branch
      %18 = sbr.rel (%p16) target = $region8
    $region5: #{tpu_custom_call.1} parent=1 // loop_body
      %s20 = ssub.s32 %s15, 1
      %s21 = ssub.s32 %s15, 2
      %s28 = sadd.s32 1, %s23
      %p29 = scmp.ge.s32.totalorder %s28, 2
      %s30 = scalar_select %p29, 0, %s28
      %s31 = sadd.s32 1, %s22
      %s32 = scalar_select %p29, %s31, %s22
      %p33 = scmp.ge.s32.totalorder %s32, 2
      %s34 = scalar_select %p33, 0, %s32
      %s35 = smul.u32 %s22, 2
      %s36 = sadd.s32 %s35, %s23
      %s37 = smul.u32 %s34, 2
      %s38 = sadd.s32 %s37, %s30
      %s39 = ssub.s32 %s36, %s38
      %p40 = scmp.eq.s32.totalorder %s39, 0
      %s42 = sadd.s32 %s41, 1
      %s43 = scalar_select %p40, %s41, %s42
      %p46 = pneg %p40
      %p47 = scmp.eq.s32.totalorder %s15, 3
      %p48 = por %p46, %p47
      %p49 = scmp.ne.s32.totalorder %s41, %s44
      %p50 = scmp.eq.s32.totalorder %s15, 0
      %p51 = por %p49, %p50
      %p52 = scmp.ne.s32.totalorder %s41, %s44
      %p53 = scmp.eq.s32.totalorder %s20, 3
      %p54 = por %p52, %p53
      %p55 = scmp.ne.s32.totalorder %s44, %s45
      %p56 = scmp.eq.s32.totalorder %s20, 0
      %p57 = por %p55, %p56
      %p58 = scmp.ne.s32.totalorder %s44, %s45
      %p59 = scmp.eq.s32.totalorder %s21, 3
      %p60 = por %p58, %p59
      %p62 = scmp.ne.s32.totalorder %s45, %s61
      %p63 = scmp.eq.s32.totalorder %s21, 0
      %p64 = por %p62, %p63
      %s65 = smul.u32 %s22, 2
      %s66 = sadd.s32 %s65, %s23
      %s67 = smul.u32 %s34, 2
      %s68 = sadd.s32 %s67, %s30
      %s69 = ssub.s32 %s66, %s68
      %p70 = scmp.eq.s32.totalorder %s69, 0
      %s72 = sadd.s32 %s71, 1
      %s73 = scalar_select %p70, %s71, %s72
      %p76 = pneg %p70
      %p77 = scmp.eq.s32.totalorder %s15, 3
      %p78 = por %p76, %p77
      %p79 = scmp.ne.s32.totalorder %s71, %s74
      %p80 = scmp.eq.s32.totalorder %s15, 0
      %p81 = por %p79, %p80
      %p82 = scmp.ne.s32.totalorder %s71, %s74
      %p83 = scmp.eq.s32.totalorder %s20, 3
      %p84 = por %p82, %p83
      %p85 = scmp.ne.s32.totalorder %s74, %s75
      %p86 = scmp.eq.s32.totalorder %s20, 0
      %p87 = por %p85, %p86
      %p88 = scmp.ne.s32.totalorder %s74, %s75
      %p89 = scmp.eq.s32.totalorder %s21, 3
      %p90 = por %p88, %p89
      %p92 = scmp.ne.s32.totalorder %s75, %s91
      %p93 = scmp.eq.s32.totalorder %s21, 0
      %p94 = por %p92, %p93
      %s95 = smul.u32 %s22, 2
      %s96 = sadd.s32 %s95, %s23
      %s97 = smul.u32 %s34, 2
      %s98 = sadd.s32 %s97, %s30
      %s99 = ssub.s32 %s96, %s98
      %p100 = scmp.eq.s32.totalorder %s99, 0
      %s102 = sadd.s32 %s101, 1
      %s103 = scalar_select %p100, %s101, %s102
      %p106 = pneg %p100
      %p107 = scmp.eq.s32.totalorder %s15, 3
      %p108 = por %p106, %p107
      %p109 = scmp.ne.s32.totalorder %s101, %s104
      %p110 = scmp.eq.s32.totalorder %s15, 0
      %p111 = por %p109, %p110
      %p112 = scmp.ne.s32.totalorder %s101, %s104
      %p113 = scmp.eq.s32.totalorder %s20, 3
      %p114 = por %p112, %p113
      %p115 = scmp.ne.s32.totalorder %s104, %s105
      %p116 = scmp.eq.s32.totalorder %s20, 0
      %p117 = por %p115, %p116
      %p118 = scmp.ne.s32.totalorder %s104, %s105
      %p119 = scmp.eq.s32.totalorder %s21, 3
      %p120 = por %p118, %p119
      %p122 = scmp.ne.s32.totalorder %s105, %s121
      %p123 = scmp.eq.s32.totalorder %s21, 0
      %p124 = por %p122, %p123
      %s125 = smul.u32 %s22, 2
      %s126 = sadd.s32 %s125, %s23
      %s127 = smul.u32 %s34, 2
      %s128 = sadd.s32 %s127, %s30
      %s129 = ssub.s32 %s126, %s128
      %p130 = scmp.eq.s32.totalorder %s129, 0
      %s132 = sadd.s32 %s131, 1
      %s133 = scalar_select %p130, %s131, %s132
      %p136 = pneg %p130
      %p137 = scmp.eq.s32.totalorder %s15, 3
      %p138 = por %p136, %p137
      %p139 = scmp.ne.s32.totalorder %s131, %s134
      %p140 = scmp.eq.s32.totalorder %s15, 0
      %p141 = por %p139, %p140
      %p142 = scmp.ne.s32.totalorder %s131, %s134
      %p143 = scmp.eq.s32.totalorder %s20, 3
      %p144 = por %p142, %p143
      %p145 = scmp.ne.s32.totalorder %s134, %s135
      %p146 = scmp.eq.s32.totalorder %s20, 0
      %p147 = por %p145, %p146
      %p148 = scmp.ne.s32.totalorder %s134, %s135
      %p149 = scmp.eq.s32.totalorder %s21, 3
      %p150 = por %p148, %p149
      %p152 = scmp.ne.s32.totalorder %s135, %s151
      %p153 = scmp.eq.s32.totalorder %s21, 0
      %p154 = por %p152, %p153
      %s155 = smul.u32 %s22, 2
      %s156 = sadd.s32 %s155, %s23
      %s157 = smul.u32 %s34, 2
      %s158 = sadd.s32 %s157, %s30
      %s159 = ssub.s32 %s156, %s158
      %p160 = scmp.eq.s32.totalorder %s159, 0
      %s162 = sadd.s32 %s161, 1
      %s163 = scalar_select %p160, %s161, %s162
      %p166 = pneg %p160
      %p167 = scmp.eq.s32.totalorder %s15, 3
      %p168 = por %p166, %p167
      %p169 = scmp.ne.s32.totalorder %s161, %s164
      %p170 = scmp.eq.s32.totalorder %s15, 0
      %p171 = por %p169, %p170
      %p172 = scmp.ne.s32.totalorder %s161, %s164
      %p173 = scmp.eq.s32.totalorder %s20, 3
      %p174 = por %p172, %p173
      %p175 = scmp.ne.s32.totalorder %s164, %s165
      %p176 = scmp.eq.s32.totalorder %s20, 0
      %p177 = por %p175, %p176
      %p178 = scmp.ne.s32.totalorder %s164, %s165
      %p179 = scmp.eq.s32.totalorder %s21, 3
      %p180 = por %p178, %p179
      %p182 = scmp.ne.s32.totalorder %s165, %s181
      %p183 = scmp.eq.s32.totalorder %s21, 0
      %p184 = por %p182, %p183
      %s185 = ssub.s32 %s22, %s34
      %p186 = scmp.eq.s32.totalorder %s185, 0
      %s188 = sadd.s32 %s187, 1
      %s189 = scalar_select %p186, %s187, %s188
      %p192 = pneg %p186
      %p193 = scmp.eq.s32.totalorder %s15, 3
      %p194 = por %p192, %p193
      %p195 = scmp.ne.s32.totalorder %s187, %s190
      %p196 = scmp.eq.s32.totalorder %s15, 0
      %p197 = por %p195, %p196
      %p198 = scmp.ne.s32.totalorder %s187, %s190
      %p199 = scmp.eq.s32.totalorder %s20, 3
      %p200 = por %p198, %p199
      %p201 = scmp.ne.s32.totalorder %s190, %s191
      %p202 = scmp.eq.s32.totalorder %s20, 0
      %p203 = por %p201, %p202
      %p204 = scmp.ne.s32.totalorder %s190, %s191
      %p205 = scmp.eq.s32.totalorder %s21, 3
      %p206 = por %p204, %p205
      %p208 = scmp.ne.s32.totalorder %s191, %s207
      %p209 = scmp.eq.s32.totalorder %s21, 0
      %p210 = por %p208, %p209
      %p211 = scmp.le.s32.totalorder 1, %s15
      %p212 = scmp.lt.s32.totalorder %s15, 5
      %p213 = pnand %p211, %p212
      %p214 = pneg %p213
      // Predicated region
      $region9: #{tpu_custom_call.1} parent=5 // pred_check
        _
      $region10: #{tpu_custom_call.1} parent=5 // pred_check_branch
        %216 = sbr.rel (%p213) target = $region12
      $region11: #{tpu_custom_call.1} parent=5 // pred_region
        %s217 = ssub.s32 %s15, 1
      $region12: #{tpu_custom_call.1} parent=5 // pred_fallthru
        _
      %p218 = scmp.lt.s32.totalorder %s15, 4
      // Predicated region
      $region13: #{tpu_custom_call.1} parent=5 // pred_check
        %p219 = pneg %p218
      $region14: #{tpu_custom_call.1} parent=5 // pred_check_branch
        %221 = sbr.rel (%p219) target = $region16
      $region15: #{tpu_custom_call.1} parent=5 // pred_region
        // Predicated region
        $region17: #{tpu_custom_call.1} parent=15 // pred_check
          %p222 = pneg %p51
        $region18: #{tpu_custom_call.1} parent=15 // pred_check_branch
          %224 = sbr.rel (%p222) target = $region20
        $region19: #{tpu_custom_call.1} parent=15 // pred_region
          %s225 = smul.u32 %s22, 2
          %s226 = sadd.s32 %s225, %s23
          %s227 = smul.u32 64, %s226
          %p228 = scmp.lt.s32.totalorder %s227, 255
          %s229 = scalar_select %p228, %s227, 255
          %s230 = smul.addr %s229, 8
          %s231 = scalar_lea.vmem %s0, %s230
          %s232 = smul.u32 %s22, 2
          %s233 = sadd.s32 %s232, %s23
          %s234 = smul.u32 64, %s233
        $region20: #{tpu_custom_call.1} parent=15 // pred_fallthru
          _
        // Predicated region
        $region21: #{tpu_custom_call.1} parent=15 // pred_check
          %p235 = pneg %p81
        $region22: #{tpu_custom_call.1} parent=15 // pred_check_branch
          %237 = sbr.rel (%p235) target = $region24
        $region23: #{tpu_custom_call.1} parent=15 // pred_region
          %s238 = smul.u32 %s22, 2
          %s239 = sadd.s32 %s238, %s23
          %s240 = smul.u32 64, %s239
          %p241 = scmp.lt.s32.totalorder %s240, 255
          %s242 = scalar_select %p241, %s240, 255
          %s243 = smul.addr %s242, 8
          %s244 = scalar_lea.vmem %s1, %s243
          %s245 = smul.u32 %s22, 2
          %s246 = sadd.s32 %s245, %s23
          %s247 = smul.u32 64, %s246
        $region24: #{tpu_custom_call.1} parent=15 // pred_fallthru
          _
        // Predicated region
        $region25: #{tpu_custom_call.1} parent=15 // pred_check
          %p248 = pneg %p111
        $region26: #{tpu_custom_call.1} parent=15 // pred_check_branch
          %250 = sbr.rel (%p248) target = $region28
        $region27: #{tpu_custom_call.1} parent=15 // pred_region
          %s251 = smul.u32 %s22, 2
          %s252 = sadd.s32 %s251, %s23
          %s253 = smul.u32 64, %s252
          %p254 = scmp.lt.s32.totalorder %s253, 255
          %s255 = scalar_select %p254, %s253, 255
          %s256 = smul.addr %s255, 8
          %s257 = scalar_lea.vmem %s2, %s256
          %s258 = smul.u32 %s22, 2
          %s259 = sadd.s32 %s258, %s23
          %s260 = smul.u32 64, %s259
        $region28: #{tpu_custom_call.1} parent=15 // pred_fallthru
          _
        // Predicated region
        $region29: #{tpu_custom_call.1} parent=15 // pred_check
          %p261 = pneg %p141
        $region30: #{tpu_custom_call.1} parent=15 // pred_check_branch
          %263 = sbr.rel (%p261) target = $region32
        $region31: #{tpu_custom_call.1} parent=15 // pred_region
          %s264 = smul.u32 %s22, 2
          %s265 = sadd.s32 %s264, %s23
          %s266 = smul.u32 64, %s265
          %p267 = scmp.lt.s32.totalorder %s266, 255
          %s268 = scalar_select %p267, %s266, 255
          %s269 = smul.addr %s268, 8
          %s270 = scalar_lea.vmem %s3, %s269
          %s271 = smul.u32 %s22, 2
          %s272 = sadd.s32 %s271, %s23
          %s273 = smul.u32 64, %s272
        $region32: #{tpu_custom_call.1} parent=15 // pred_fallthru
          _
      $region16: #{tpu_custom_call.1} parent=5 // pred_fallthru
        _
      %p274 = scmp.le.s32.totalorder 1, %s15
      %p275 = scmp.lt.s32.totalorder %s15, 5
      %p276 = pnand %p274, %p275
      %p277 = pneg %p276
      // Predicated region
      $region33: #{tpu_custom_call.1} parent=5 // pred_check
        _
      $region34: #{tpu_custom_call.1} parent=5 // pred_check_branch
        %279 = sbr.rel (%p276) target = $region36
      $region35: #{tpu_custom_call.1} parent=5 // pred_region
        %s280 = ssub.s32 %s15, 1
        %s281 = smul.u32 %s24, 2
        %s282 = sadd.s32 %s281, %s25
        %s283 = smul.u32 64, %s282
        %p284 = scmp.lt.s32.totalorder %s283, 255
        %s285 = scalar_select %p284, %s283, 255
        %s286 = smul.addr %s285, 8
        %s287 = scalar_lea.vmem %s0, %s286
        %p288 = pneg %p57
        %p289 = pneg %p54
        %s290 = smul.u32 %s24, 2
        %s291 = sadd.s32 %s290, %s25
        %s292 = smul.u32 64, %s291
        %p293 = scmp.lt.s32.totalorder %s292, 255
        %s294 = scalar_select %p293, %s292, 255
        %s295 = smul.addr %s294, 8
        %s296 = scalar_lea.vmem %s1, %s295
        %p297 = pneg %p87
        %p298 = pneg %p84
        %s299 = smul.u32 %s24, 2
        %s300 = sadd.s32 %s299, %s25
        %s301 = smul.u32 64, %s300
        %p302 = scmp.lt.s32.totalorder %s301, 255
        %s303 = scalar_select %p302, %s301, 255
        %s304 = smul.addr %s303, 8
        %s305 = scalar_lea.vmem %s2, %s304
        %p306 = pneg %p117
        %p307 = pneg %p114
        %s308 = smul.u32 %s24, 2
        %s309 = sadd.s32 %s308, %s25
        %s310 = smul.u32 64, %s309
        %p311 = scmp.lt.s32.totalorder %s310, 255
        %s312 = scalar_select %p311, %s310, 255
        %s313 = smul.addr %s312, 8
        %s314 = scalar_lea.vmem %s3, %s313
        %p315 = pneg %p147
        %p316 = pneg %p144
        %p317 = pneg %p177
        %p318 = pneg %p174
        %s319 = smul.u32 %s24, 2
        %s320 = sadd.s32 %s319, %s25
        %s321 = smul.u32 64, %s320
        %p322 = scmp.lt.s32.totalorder %s321, 255
        %s323 = scalar_select %p322, %s321, 255
        %s324 = smul.addr %s323, 8
        %s325 = scalar_lea.vmem %s4, %s324
        %p326 = pneg %p203
        %p327 = pneg %p200
        %s328 = sand.u32 %s190, 1
        %s329 = scalar_lea.sflag [#allocation3], %s328
        %s330 = sand.u32 %s190, 1
        %s331 = smul.addr %s330, 2
        %s332 = scalar_lea.vmem [#allocation2], %s331
        %s333 = smul.u32 %s24, 2
        %s334 = sadd.s32 %s333, %s25
        %s335 = smul.u32 64, %s334
        %p336 = scmp.lt.s32.totalorder %s335, 255
        %s337 = scalar_select %p336, %s335, 255
        %s338 = smul.addr %s337, 8
        %s339 = scalar_lea.vmem %s0, %s338
        %s340 = smul.u32 %s24, 2
        %s341 = sadd.s32 %s340, %s25
        %s342 = smul.u32 64, %s341
        %s343 = smul.u32 %s24, 2
        %s344 = sadd.s32 %s343, %s25
        %s345 = smul.u32 64, %s344
        %p346 = scmp.lt.s32.totalorder %s345, 255
        %s347 = scalar_select %p346, %s345, 255
        %s348 = smul.addr %s347, 8
        %s349 = scalar_lea.vmem %s1, %s348
        %s350 = smul.u32 %s24, 2
        %s351 = sadd.s32 %s350, %s25
        %s352 = smul.u32 64, %s351
        %s353 = smul.u32 %s24, 2
        %s354 = sadd.s32 %s353, %s25
        %s355 = smul.u32 64, %s354
        %p356 = scmp.lt.s32.totalorder %s355, 255
        %s357 = scalar_select %p356, %s355, 255
        %s358 = smul.addr %s357, 8
        %s359 = scalar_lea.vmem %s2, %s358
        %s360 = smul.u32 %s24, 2
        %s361 = sadd.s32 %s360, %s25
        %s362 = smul.u32 64, %s361
        %s363 = smul.u32 %s24, 2
        %s364 = sadd.s32 %s363, %s25
        %s365 = smul.u32 64, %s364
        %p366 = scmp.lt.s32.totalorder %s365, 255
        %s367 = scalar_select %p366, %s365, 255
        %s368 = smul.addr %s367, 8
        %s369 = scalar_lea.vmem %s3, %s368
        %s370 = smul.u32 %s24, 2
        %s371 = sadd.s32 %s370, %s25
        %s372 = smul.u32 64, %s371
        %s373 = smul.u32 %s24, 2
        %s374 = sadd.s32 %s373, %s25
        %s375 = smul.u32 64, %s374
        %p376 = scmp.lt.s32.totalorder %s375, 255
        %s377 = scalar_select %p376, %s375, 255
        %s378 = smul.addr %s377, 8
        %s379 = scalar_lea.vmem %s4, %s378
        %s380 = smul.u32 %s24, 2
        %s381 = sadd.s32 %s380, %s25
        %s382 = smul.u32 64, %s381
        %p383 = scmp.eq.s32.totalorder %s25, 0
        // Predicated region
        $region37: #{tpu_custom_call.1} parent=35 // pred_check
          %p384 = pneg %p383
        $region38: #{tpu_custom_call.1} parent=35 // pred_check_branch
          %386 = sbr.rel (%p384) target = $region40
        $region39: #{tpu_custom_call.1} parent=35 // pred_region
          %387 = vst [vmem:[%s332] sm:$0x3] 0.0
        $region40: #{tpu_custom_call.1} parent=35 // pred_fallthru
          _
        %v388 = vld [vmem:[%s339] sm:$0xff]
        %v389 = vld [vmem:[%s339 + $0x8] sm:$0xff]
        %v390 = vld [vmem:[%s339 + $0x10] sm:$0xff]
        %v391 = vld [vmem:[%s339 + $0x18] sm:$0xff]
        %v392 = vld [vmem:[%s339 + $0x20] sm:$0xff]
        %v393 = vld [vmem:[%s339 + $0x28] sm:$0xff]
        %v394 = vld [vmem:[%s339 + $0x30] sm:$0xff]
        %v395 = vld [vmem:[%s339 + $0x38] sm:$0xff]
        %v396 = vld [vmem:[%s339 + $0x40] sm:$0xff]
        %v397 = vld [vmem:[%s339 + $0x48] sm:$0xff]
        %v398 = vld [vmem:[%s339 + $0x50] sm:$0xff]
        %v399 = vld [vmem:[%s339 + $0x58] sm:$0xff]
        %v400 = vld [vmem:[%s339 + $0x60] sm:$0xff]
        %v401 = vld [vmem:[%s339 + $0x68] sm:$0xff]
        %v402 = vld [vmem:[%s339 + $0x70] sm:$0xff]
        %v403 = vld [vmem:[%s339 + $0x78] sm:$0xff]
        %v404 = vld [vmem:[%s339 + $0x80] sm:$0xff]
        %v405 = vld [vmem:[%s339 + $0x88] sm:$0xff]
        %v406 = vld [vmem:[%s339 + $0x90] sm:$0xff]
        %v407 = vld [vmem:[%s339 + $0x98] sm:$0xff]
        %v408 = vld [vmem:[%s339 + $0xa0] sm:$0xff]
        %v409 = vld [vmem:[%s339 + $0xa8] sm:$0xff]
        %v410 = vld [vmem:[%s339 + $0xb0] sm:$0xff]
        %v411 = vld [vmem:[%s339 + $0xb8] sm:$0xff]
        %v412 = vld [vmem:[%s339 + $0xc0] sm:$0xff]
        %v413 = vld [vmem:[%s339 + $0xc8] sm:$0xff]
        %v414 = vld [vmem:[%s339 + $0xd0] sm:$0xff]
        %v415 = vld [vmem:[%s339 + $0xd8] sm:$0xff]
        %v416 = vld [vmem:[%s339 + $0xe0] sm:$0xff]
        %v417 = vld [vmem:[%s339 + $0xe8] sm:$0xff]
        %v418 = vld [vmem:[%s339 + $0xf0] sm:$0xff]
        %v419 = vld [vmem:[%s339 + $0xf8] sm:$0xff]
        %v420 = vld [vmem:[%s339 + $0x100] sm:$0xff]
        %v421 = vld [vmem:[%s339 + $0x108] sm:$0xff]
        %v422 = vld [vmem:[%s339 + $0x110] sm:$0xff]
        %v423 = vld [vmem:[%s339 + $0x118] sm:$0xff]
        %v424 = vld [vmem:[%s339 + $0x120] sm:$0xff]
        %v425 = vld [vmem:[%s339 + $0x128] sm:$0xff]
        %v426 = vld [vmem:[%s339 + $0x130] sm:$0xff]
        %v427 = vld [vmem:[%s339 + $0x138] sm:$0xff]
        %v428 = vld [vmem:[%s339 + $0x140] sm:$0xff]
        %v429 = vld [vmem:[%s339 + $0x148] sm:$0xff]
        %v430 = vld [vmem:[%s339 + $0x150] sm:$0xff]
        %v431 = vld [vmem:[%s339 + $0x158] sm:$0xff]
        %v432 = vld [vmem:[%s339 + $0x160] sm:$0xff]
        %v433 = vld [vmem:[%s339 + $0x168] sm:$0xff]
        %v434 = vld [vmem:[%s339 + $0x170] sm:$0xff]
        %v435 = vld [vmem:[%s339 + $0x178] sm:$0xff]
        %v436 = vld [vmem:[%s339 + $0x180] sm:$0xff]
        %v437 = vld [vmem:[%s339 + $0x188] sm:$0xff]
        %v438 = vld [vmem:[%s339 + $0x190] sm:$0xff]
        %v439 = vld [vmem:[%s339 + $0x198] sm:$0xff]
        %v440 = vld [vmem:[%s339 + $0x1a0] sm:$0xff]
        %v441 = vld [vmem:[%s339 + $0x1a8] sm:$0xff]
        %v442 = vld [vmem:[%s339 + $0x1b0] sm:$0xff]
        %v443 = vld [vmem:[%s339 + $0x1b8] sm:$0xff]
        %v444 = vld [vmem:[%s339 + $0x1c0] sm:$0xff]
        %v445 = vld [vmem:[%s339 + $0x1c8] sm:$0xff]
        %v446 = vld [vmem:[%s339 + $0x1d0] sm:$0xff]
        %v447 = vld [vmem:[%s339 + $0x1d8] sm:$0xff]
        %v448 = vld [vmem:[%s339 + $0x1e0] sm:$0xff]
        %v449 = vld [vmem:[%s339 + $0x1e8] sm:$0xff]
        %v450 = vld [vmem:[%s339 + $0x1f0] sm:$0xff]
        %v451 = vld [vmem:[%s339 + $0x1f8] sm:$0xff]
        %v452 = vld [vmem:[%s349] sm:$0xff]
        %v453 = vld [vmem:[%s349 + $0x8] sm:$0xff]
        %v454 = vld [vmem:[%s349 + $0x10] sm:$0xff]
        %v455 = vld [vmem:[%s349 + $0x18] sm:$0xff]
        %v456 = vld [vmem:[%s349 + $0x20] sm:$0xff]
        %v457 = vld [vmem:[%s349 + $0x28] sm:$0xff]
        %v458 = vld [vmem:[%s349 + $0x30] sm:$0xff]
        %v459 = vld [vmem:[%s349 + $0x38] sm:$0xff]
        %v460 = vld [vmem:[%s349 + $0x40] sm:$0xff]
        %v461 = vld [vmem:[%s349 + $0x48] sm:$0xff]
        %v462 = vld [vmem:[%s349 + $0x50] sm:$0xff]
        %v463 = vld [vmem:[%s349 + $0x58] sm:$0xff]
        %v464 = vld [vmem:[%s349 + $0x60] sm:$0xff]
        %v465 = vld [vmem:[%s349 + $0x68] sm:$0xff]
        %v466 = vld [vmem:[%s349 + $0x70] sm:$0xff]
        %v467 = vld [vmem:[%s349 + $0x78] sm:$0xff]
        %v468 = vld [vmem:[%s349 + $0x80] sm:$0xff]
        %v469 = vld [vmem:[%s349 + $0x88] sm:$0xff]
        %v470 = vld [vmem:[%s349 + $0x90] sm:$0xff]
        %v471 = vld [vmem:[%s349 + $0x98] sm:$0xff]
        %v472 = vld [vmem:[%s349 + $0xa0] sm:$0xff]
        %v473 = vld [vmem:[%s349 + $0xa8] sm:$0xff]
        %v474 = vld [vmem:[%s349 + $0xb0] sm:$0xff]
        %v475 = vld [vmem:[%s349 + $0xb8] sm:$0xff]
        %v476 = vld [vmem:[%s349 + $0xc0] sm:$0xff]
        %v477 = vld [vmem:[%s349 + $0xc8] sm:$0xff]
        %v478 = vld [vmem:[%s349 + $0xd0] sm:$0xff]
        %v479 = vld [vmem:[%s349 + $0xd8] sm:$0xff]
        %v480 = vld [vmem:[%s349 + $0xe0] sm:$0xff]
        %v481 = vld [vmem:[%s349 + $0xe8] sm:$0xff]
        %v482 = vld [vmem:[%s349 + $0xf0] sm:$0xff]
        %v483 = vld [vmem:[%s349 + $0xf8] sm:$0xff]
        %v484 = vld [vmem:[%s349 + $0x100] sm:$0xff]
        %v485 = vld [vmem:[%s349 + $0x108] sm:$0xff]
        %v486 = vld [vmem:[%s349 + $0x110] sm:$0xff]
        %v487 = vld [vmem:[%s349 + $0x118] sm:$0xff]
        %v488 = vld [vmem:[%s349 + $0x120] sm:$0xff]
        %v489 = vld [vmem:[%s349 + $0x128] sm:$0xff]
        %v490 = vld [vmem:[%s349 + $0x130] sm:$0xff]
        %v491 = vld [vmem:[%s349 + $0x138] sm:$0xff]
        %v492 = vld [vmem:[%s349 + $0x140] sm:$0xff]
        %v493 = vld [vmem:[%s349 + $0x148] sm:$0xff]
        %v494 = vld [vmem:[%s349 + $0x150] sm:$0xff]
        %v495 = vld [vmem:[%s349 + $0x158] sm:$0xff]
        %v496 = vld [vmem:[%s349 + $0x160] sm:$0xff]
        %v497 = vld [vmem:[%s349 + $0x168] sm:$0xff]
        %v498 = vld [vmem:[%s349 + $0x170] sm:$0xff]
        %v499 = vld [vmem:[%s349 + $0x178] sm:$0xff]
        %v500 = vld [vmem:[%s349 + $0x180] sm:$0xff]
        %v501 = vld [vmem:[%s349 + $0x188] sm:$0xff]
        %v502 = vld [vmem:[%s349 + $0x190] sm:$0xff]
        %v503 = vld [vmem:[%s349 + $0x198] sm:$0xff]
        %v504 = vld [vmem:[%s349 + $0x1a0] sm:$0xff]
        %v505 = vld [vmem:[%s349 + $0x1a8] sm:$0xff]
        %v506 = vld [vmem:[%s349 + $0x1b0] sm:$0xff]
        %v507 = vld [vmem:[%s349 + $0x1b8] sm:$0xff]
        %v508 = vld [vmem:[%s349 + $0x1c0] sm:$0xff]
        %v509 = vld [vmem:[%s349 + $0x1c8] sm:$0xff]
        %v510 = vld [vmem:[%s349 + $0x1d0] sm:$0xff]
        %v511 = vld [vmem:[%s349 + $0x1d8] sm:$0xff]
        %v512 = vld [vmem:[%s349 + $0x1e0] sm:$0xff]
        %v513 = vld [vmem:[%s349 + $0x1e8] sm:$0xff]
        %v514 = vld [vmem:[%s349 + $0x1f0] sm:$0xff]
        %v515 = vld [vmem:[%s349 + $0x1f8] sm:$0xff]
        %v516 = vmul.f32 %v388, %v452
        %v517 = vmul.f32 %v389, %v453
        %v518 = vmul.f32 %v390, %v454
        %v519 = vmul.f32 %v391, %v455
        %v520 = vmul.f32 %v392, %v456
        %v521 = vmul.f32 %v393, %v457
        %v522 = vmul.f32 %v394, %v458
        %v523 = vmul.f32 %v395, %v459
        %v524 = vmul.f32 %v396, %v460
        %v525 = vmul.f32 %v397, %v461
        %v526 = vmul.f32 %v398, %v462
        %v527 = vmul.f32 %v399, %v463
        %v528 = vmul.f32 %v400, %v464
        %v529 = vmul.f32 %v401, %v465
        %v530 = vmul.f32 %v402, %v466
        %v531 = vmul.f32 %v403, %v467
        %v532 = vmul.f32 %v404, %v468
        %v533 = vmul.f32 %v405, %v469
        %v534 = vmul.f32 %v406, %v470
        %v535 = vmul.f32 %v407, %v471
        %v536 = vmul.f32 %v408, %v472
        %v537 = vmul.f32 %v409, %v473
        %v538 = vmul.f32 %v410, %v474
        %v539 = vmul.f32 %v411, %v475
        %v540 = vmul.f32 %v412, %v476
        %v541 = vmul.f32 %v413, %v477
        %v542 = vmul.f32 %v414, %v478
        %v543 = vmul.f32 %v415, %v479
        %v544 = vmul.f32 %v416, %v480
        %v545 = vmul.f32 %v417, %v481
        %v546 = vmul.f32 %v418, %v482
        %v547 = vmul.f32 %v419, %v483
        %v548 = vmul.f32 %v420, %v484
        %v549 = vmul.f32 %v421, %v485
        %v550 = vmul.f32 %v422, %v486
        %v551 = vmul.f32 %v423, %v487
        %v552 = vmul.f32 %v424, %v488
        %v553 = vmul.f32 %v425, %v489
        %v554 = vmul.f32 %v426, %v490
        %v555 = vmul.f32 %v427, %v491
        %v556 = vmul.f32 %v428, %v492
        %v557 = vmul.f32 %v429, %v493
        %v558 = vmul.f32 %v430, %v494
        %v559 = vmul.f32 %v431, %v495
        %v560 = vmul.f32 %v432, %v496
        %v561 = vmul.f32 %v433, %v497
        %v562 = vmul.f32 %v434, %v498
        %v563 = vmul.f32 %v435, %v499
        %v564 = vmul.f32 %v436, %v500
        %v565 = vmul.f32 %v437, %v501
        %v566 = vmul.f32 %v438, %v502
        %v567 = vmul.f32 %v439, %v503
        %v568 = vmul.f32 %v440, %v504
        %v569 = vmul.f32 %v441, %v505
        %v570 = vmul.f32 %v442, %v506
        %v571 = vmul.f32 %v443, %v507
        %v572 = vmul.f32 %v444, %v508
        %v573 = vmul.f32 %v445, %v509
        %v574 = vmul.f32 %v446, %v510
        %v575 = vmul.f32 %v447, %v511
        %v576 = vmul.f32 %v448, %v512
        %v577 = vmul.f32 %v449, %v513
        %v578 = vmul.f32 %v450, %v514
        %v579 = vmul.f32 %v451, %v515
        %vm580 = vcmask 261120
        %v581 = vsel %vm580, %v516, 0.0
        %582 = vadd.xlane.f32.xlu0 %v581
        %v583 = vpop.xlane.xlu0 %582
        %v584 = vsel %vm580, %v517, 0.0
        %585 = vadd.xlane.f32.xlu0 %v584
        %v586 = vpop.xlane.xlu0 %585
        %v587 = vsel %vm580, %v518, 0.0
        %588 = vadd.xlane.f32.xlu0 %v587
        %v589 = vpop.xlane.xlu0 %588
        %v590 = vsel %vm580, %v519, 0.0
        %591 = vadd.xlane.f32.xlu0 %v590
        %v592 = vpop.xlane.xlu0 %591
        %v593 = vsel %vm580, %v520, 0.0
        %594 = vadd.xlane.f32.xlu0 %v593
        %v595 = vpop.xlane.xlu0 %594
        %v596 = vsel %vm580, %v521, 0.0
        %597 = vadd.xlane.f32.xlu0 %v596
        %v598 = vpop.xlane.xlu0 %597
        %v599 = vsel %vm580, %v522, 0.0
        %600 = vadd.xlane.f32.xlu0 %v599
        %v601 = vpop.xlane.xlu0 %600
        %v602 = vsel %vm580, %v523, 0.0
        %603 = vadd.xlane.f32.xlu0 %v602
        %v604 = vpop.xlane.xlu0 %603
        %v605 = vsel %vm580, %v524, 0.0
        %606 = vadd.xlane.f32.xlu0 %v605
        %v607 = vpop.xlane.xlu0 %606
        %v608 = vsel %vm580, %v525, 0.0
        %609 = vadd.xlane.f32.xlu0 %v608
        %v610 = vpop.xlane.xlu0 %609
        %v611 = vsel %vm580, %v526, 0.0
        %612 = vadd.xlane.f32.xlu0 %v611
        %v613 = vpop.xlane.xlu0 %612
        %v614 = vsel %vm580, %v527, 0.0
        %615 = vadd.xlane.f32.xlu0 %v614
        %v616 = vpop.xlane.xlu0 %615
        %v617 = vsel %vm580, %v528, 0.0
        %618 = vadd.xlane.f32.xlu0 %v617
        %v619 = vpop.xlane.xlu0 %618
        %v620 = vsel %vm580, %v529, 0.0
        %621 = vadd.xlane.f32.xlu0 %v620
        %v622 = vpop.xlane.xlu0 %621
        %v623 = vsel %vm580, %v530, 0.0
        %624 = vadd.xlane.f32.xlu0 %v623
        %v625 = vpop.xlane.xlu0 %624
        %v626 = vsel %vm580, %v531, 0.0
        %627 = vadd.xlane.f32.xlu0 %v626
        %v628 = vpop.xlane.xlu0 %627
        %v629 = vsel %vm580, %v532, 0.0
        %630 = vadd.xlane.f32.xlu0 %v629
        %v631 = vpop.xlane.xlu0 %630
        %v632 = vsel %vm580, %v533, 0.0
        %633 = vadd.xlane.f32.xlu0 %v632
        %v634 = vpop.xlane.xlu0 %633
        %v635 = vsel %vm580, %v534, 0.0
        %636 = vadd.xlane.f32.xlu0 %v635
        %v637 = vpop.xlane.xlu0 %636
        %v638 = vsel %vm580, %v535, 0.0
        %639 = vadd.xlane.f32.xlu0 %v638
        %v640 = vpop.xlane.xlu0 %639
        %v641 = vsel %vm580, %v536, 0.0
        %642 = vadd.xlane.f32.xlu0 %v641
        %v643 = vpop.xlane.xlu0 %642
        %v644 = vsel %vm580, %v537, 0.0
        %645 = vadd.xlane.f32.xlu0 %v644
        %v646 = vpop.xlane.xlu0 %645
        %v647 = vsel %vm580, %v538, 0.0
        %648 = vadd.xlane.f32.xlu0 %v647
        %v649 = vpop.xlane.xlu0 %648
        %v650 = vsel %vm580, %v539, 0.0
        %651 = vadd.xlane.f32.xlu0 %v650
        %v652 = vpop.xlane.xlu0 %651
        %v653 = vsel %vm580, %v540, 0.0
        %654 = vadd.xlane.f32.xlu0 %v653
        %v655 = vpop.xlane.xlu0 %654
        %v656 = vsel %vm580, %v541, 0.0
        %657 = vadd.xlane.f32.xlu0 %v656
        %v658 = vpop.xlane.xlu0 %657
        %v659 = vsel %vm580, %v542, 0.0
        %660 = vadd.xlane.f32.xlu0 %v659
        %v661 = vpop.xlane.xlu0 %660
        %v662 = vsel %vm580, %v543, 0.0
        %663 = vadd.xlane.f32.xlu0 %v662
        %v664 = vpop.xlane.xlu0 %663
        %v665 = vsel %vm580, %v544, 0.0
        %666 = vadd.xlane.f32.xlu0 %v665
        %v667 = vpop.xlane.xlu0 %666
        %v668 = vsel %vm580, %v545, 0.0
        %669 = vadd.xlane.f32.xlu0 %v668
        %v670 = vpop.xlane.xlu0 %669
        %v671 = vsel %vm580, %v546, 0.0
        %672 = vadd.xlane.f32.xlu0 %v671
        %v673 = vpop.xlane.xlu0 %672
        %v674 = vsel %vm580, %v547, 0.0
        %675 = vadd.xlane.f32.xlu0 %v674
        %v676 = vpop.xlane.xlu0 %675
        %v677 = vsel %vm580, %v548, 0.0
        %678 = vadd.xlane.f32.xlu0 %v677
        %v679 = vpop.xlane.xlu0 %678
        %v680 = vsel %vm580, %v549, 0.0
        %681 = vadd.xlane.f32.xlu0 %v680
        %v682 = vpop.xlane.xlu0 %681
        %v683 = vsel %vm580, %v550, 0.0
        %684 = vadd.xlane.f32.xlu0 %v683
        %v685 = vpop.xlane.xlu0 %684
        %v686 = vsel %vm580, %v551, 0.0
        %687 = vadd.xlane.f32.xlu0 %v686
        %v688 = vpop.xlane.xlu0 %687
        %v689 = vsel %vm580, %v552, 0.0
        %690 = vadd.xlane.f32.xlu0 %v689
        %v691 = vpop.xlane.xlu0 %690
        %v692 = vsel %vm580, %v553, 0.0
        %693 = vadd.xlane.f32.xlu0 %v692
        %v694 = vpop.xlane.xlu0 %693
        %v695 = vsel %vm580, %v554, 0.0
        %696 = vadd.xlane.f32.xlu0 %v695
        %v697 = vpop.xlane.xlu0 %696
        %v698 = vsel %vm580, %v555, 0.0
        %699 = vadd.xlane.f32.xlu0 %v698
        %v700 = vpop.xlane.xlu0 %699
        %v701 = vsel %vm580, %v556, 0.0
        %702 = vadd.xlane.f32.xlu0 %v701
        %v703 = vpop.xlane.xlu0 %702
        %v704 = vsel %vm580, %v557, 0.0
        %705 = vadd.xlane.f32.xlu0 %v704
        %v706 = vpop.xlane.xlu0 %705
        %v707 = vsel %vm580, %v558, 0.0
        %708 = vadd.xlane.f32.xlu0 %v707
        %v709 = vpop.xlane.xlu0 %708
        %v710 = vsel %vm580, %v559, 0.0
        %711 = vadd.xlane.f32.xlu0 %v710
        %v712 = vpop.xlane.xlu0 %711
        %v713 = vsel %vm580, %v560, 0.0
        %714 = vadd.xlane.f32.xlu0 %v713
        %v715 = vpop.xlane.xlu0 %714
        %v716 = vsel %vm580, %v561, 0.0
        %717 = vadd.xlane.f32.xlu0 %v716
        %v718 = vpop.xlane.xlu0 %717
        %v719 = vsel %vm580, %v562, 0.0
        %720 = vadd.xlane.f32.xlu0 %v719
        %v721 = vpop.xlane.xlu0 %720
        %v722 = vsel %vm580, %v563, 0.0
        %723 = vadd.xlane.f32.xlu0 %v722
        %v724 = vpop.xlane.xlu0 %723
        %v725 = vsel %vm580, %v564, 0.0
        %726 = vadd.xlane.f32.xlu0 %v725
        %v727 = vpop.xlane.xlu0 %726
        %v728 = vsel %vm580, %v565, 0.0
        %729 = vadd.xlane.f32.xlu0 %v728
        %v730 = vpop.xlane.xlu0 %729
        %v731 = vsel %vm580, %v566, 0.0
        %732 = vadd.xlane.f32.xlu0 %v731
        %v733 = vpop.xlane.xlu0 %732
        %v734 = vsel %vm580, %v567, 0.0
        %735 = vadd.xlane.f32.xlu0 %v734
        %v736 = vpop.xlane.xlu0 %735
        %v737 = vsel %vm580, %v568, 0.0
        %738 = vadd.xlane.f32.xlu0 %v737
        %v739 = vpop.xlane.xlu0 %738
        %v740 = vsel %vm580, %v569, 0.0
        %741 = vadd.xlane.f32.xlu0 %v740
        %v742 = vpop.xlane.xlu0 %741
        %v743 = vsel %vm580, %v570, 0.0
        %744 = vadd.xlane.f32.xlu0 %v743
        %v745 = vpop.xlane.xlu0 %744
        %v746 = vsel %vm580, %v571, 0.0
        %747 = vadd.xlane.f32.xlu0 %v746
        %v748 = vpop.xlane.xlu0 %747
        %v749 = vsel %vm580, %v572, 0.0
        %750 = vadd.xlane.f32.xlu0 %v749
        %v751 = vpop.xlane.xlu0 %750
        %v752 = vsel %vm580, %v573, 0.0
        %753 = vadd.xlane.f32.xlu0 %v752
        %v754 = vpop.xlane.xlu0 %753
        %v755 = vsel %vm580, %v574, 0.0
        %756 = vadd.xlane.f32.xlu0 %v755
        %v757 = vpop.xlane.xlu0 %756
        %v758 = vsel %vm580, %v575, 0.0
        %759 = vadd.xlane.f32.xlu0 %v758
        %v760 = vpop.xlane.xlu0 %759
        %v761 = vsel %vm580, %v576, 0.0
        %762 = vadd.xlane.f32.xlu0 %v761
        %v763 = vpop.xlane.xlu0 %762
        %v764 = vsel %vm580, %v577, 0.0
        %765 = vadd.xlane.f32.xlu0 %v764
        %v766 = vpop.xlane.xlu0 %765
        %v767 = vsel %vm580, %v578, 0.0
        %768 = vadd.xlane.f32.xlu0 %v767
        %v769 = vpop.xlane.xlu0 %768
        %v770 = vsel %vm580, %v579, 0.0
        %771 = vadd.xlane.f32.xlu0 %v770
        %v772 = vpop.xlane.xlu0 %771
        %vm773 = vcmask 7168
        %774 = vst.msk [vmem:[%s379] sm:$0xff] %vm773, %v583
        %775 = vst.msk [vmem:[%s379 + $0x8] sm:$0xff] %vm773, %v586
        %776 = vst.msk [vmem:[%s379 + $0x10] sm:$0xff] %vm773, %v589
        %777 = vst.msk [vmem:[%s379 + $0x18] sm:$0xff] %vm773, %v592
        %778 = vst.msk [vmem:[%s379 + $0x20] sm:$0xff] %vm773, %v595
        %779 = vst.msk [vmem:[%s379 + $0x28] sm:$0xff] %vm773, %v598
        %780 = vst.msk [vmem:[%s379 + $0x30] sm:$0xff] %vm773, %v601
        %781 = vst.msk [vmem:[%s379 + $0x38] sm:$0xff] %vm773, %v604
        %782 = vst.msk [vmem:[%s379 + $0x40] sm:$0xff] %vm773, %v607
        %783 = vst.msk [vmem:[%s379 + $0x48] sm:$0xff] %vm773, %v610
        %784 = vst.msk [vmem:[%s379 + $0x50] sm:$0xff] %vm773, %v613
        %785 = vst.msk [vmem:[%s379 + $0x58] sm:$0xff] %vm773, %v616
        %786 = vst.msk [vmem:[%s379 + $0x60] sm:$0xff] %vm773, %v619
        %787 = vst.msk [vmem:[%s379 + $0x68] sm:$0xff] %vm773, %v622
        %788 = vst.msk [vmem:[%s379 + $0x70] sm:$0xff] %vm773, %v625
        %789 = vst.msk [vmem:[%s379 + $0x78] sm:$0xff] %vm773, %v628
        %790 = vst.msk [vmem:[%s379 + $0x80] sm:$0xff] %vm773, %v631
        %791 = vst.msk [vmem:[%s379 + $0x88] sm:$0xff] %vm773, %v634
        %792 = vst.msk [vmem:[%s379 + $0x90] sm:$0xff] %vm773, %v637
        %793 = vst.msk [vmem:[%s379 + $0x98] sm:$0xff] %vm773, %v640
        %794 = vst.msk [vmem:[%s379 + $0xa0] sm:$0xff] %vm773, %v643
        %795 = vst.msk [vmem:[%s379 + $0xa8] sm:$0xff] %vm773, %v646
        %796 = vst.msk [vmem:[%s379 + $0xb0] sm:$0xff] %vm773, %v649
        %797 = vst.msk [vmem:[%s379 + $0xb8] sm:$0xff] %vm773, %v652
        %798 = vst.msk [vmem:[%s379 + $0xc0] sm:$0xff] %vm773, %v655
        %799 = vst.msk [vmem:[%s379 + $0xc8] sm:$0xff] %vm773, %v658
        %800 = vst.msk [vmem:[%s379 + $0xd0] sm:$0xff] %vm773, %v661
        %801 = vst.msk [vmem:[%s379 + $0xd8] sm:$0xff] %vm773, %v664
        %802 = vst.msk [vmem:[%s379 + $0xe0] sm:$0xff] %vm773, %v667
        %803 = vst.msk [vmem:[%s379 + $0xe8] sm:$0xff] %vm773, %v670
        %804 = vst.msk [vmem:[%s379 + $0xf0] sm:$0xff] %vm773, %v673
        %805 = vst.msk [vmem:[%s379 + $0xf8] sm:$0xff] %vm773, %v676
        %806 = vst.msk [vmem:[%s379 + $0x100] sm:$0xff] %vm773, %v679
        %807 = vst.msk [vmem:[%s379 + $0x108] sm:$0xff] %vm773, %v682
        %808 = vst.msk [vmem:[%s379 + $0x110] sm:$0xff] %vm773, %v685
        %809 = vst.msk [vmem:[%s379 + $0x118] sm:$0xff] %vm773, %v688
        %810 = vst.msk [vmem:[%s379 + $0x120] sm:$0xff] %vm773, %v691
        %811 = vst.msk [vmem:[%s379 + $0x128] sm:$0xff] %vm773, %v694
        %812 = vst.msk [vmem:[%s379 + $0x130] sm:$0xff] %vm773, %v697
        %813 = vst.msk [vmem:[%s379 + $0x138] sm:$0xff] %vm773, %v700
        %814 = vst.msk [vmem:[%s379 + $0x140] sm:$0xff] %vm773, %v703
        %815 = vst.msk [vmem:[%s379 + $0x148] sm:$0xff] %vm773, %v706
        %816 = vst.msk [vmem:[%s379 + $0x150] sm:$0xff] %vm773, %v709
        %817 = vst.msk [vmem:[%s379 + $0x158] sm:$0xff] %vm773, %v712
        %818 = vst.msk [vmem:[%s379 + $0x160] sm:$0xff] %vm773, %v715
        %819 = vst.msk [vmem:[%s379 + $0x168] sm:$0xff] %vm773, %v718
        %820 = vst.msk [vmem:[%s379 + $0x170] sm:$0xff] %vm773, %v721
        %821 = vst.msk [vmem:[%s379 + $0x178] sm:$0xff] %vm773, %v724
        %822 = vst.msk [vmem:[%s379 + $0x180] sm:$0xff] %vm773, %v727
        %823 = vst.msk [vmem:[%s379 + $0x188] sm:$0xff] %vm773, %v730
        %824 = vst.msk [vmem:[%s379 + $0x190] sm:$0xff] %vm773, %v733
        %825 = vst.msk [vmem:[%s379 + $0x198] sm:$0xff] %vm773, %v736
        %826 = vst.msk [vmem:[%s379 + $0x1a0] sm:$0xff] %vm773, %v739
        %827 = vst.msk [vmem:[%s379 + $0x1a8] sm:$0xff] %vm773, %v742
        %828 = vst.msk [vmem:[%s379 + $0x1b0] sm:$0xff] %vm773, %v745
        %829 = vst.msk [vmem:[%s379 + $0x1b8] sm:$0xff] %vm773, %v748
        %830 = vst.msk [vmem:[%s379 + $0x1c0] sm:$0xff] %vm773, %v751
        %831 = vst.msk [vmem:[%s379 + $0x1c8] sm:$0xff] %vm773, %v754
        %832 = vst.msk [vmem:[%s379 + $0x1d0] sm:$0xff] %vm773, %v757
        %833 = vst.msk [vmem:[%s379 + $0x1d8] sm:$0xff] %vm773, %v760
        %834 = vst.msk [vmem:[%s379 + $0x1e0] sm:$0xff] %vm773, %v763
        %835 = vst.msk [vmem:[%s379 + $0x1e8] sm:$0xff] %vm773, %v766
        %836 = vst.msk [vmem:[%s379 + $0x1f0] sm:$0xff] %vm773, %v769
        %837 = vst.msk [vmem:[%s379 + $0x1f8] sm:$0xff] %vm773, %v772
        %v838 = vld [vmem:[%s369] sm:$0xff]
        %v839 = vld [vmem:[%s369 + $0x8] sm:$0xff]
        %v840 = vld [vmem:[%s369 + $0x10] sm:$0xff]
        %v841 = vld [vmem:[%s369 + $0x18] sm:$0xff]
        %v842 = vld [vmem:[%s369 + $0x20] sm:$0xff]
        %v843 = vld [vmem:[%s369 + $0x28] sm:$0xff]
        %v844 = vld [vmem:[%s369 + $0x30] sm:$0xff]
        %v845 = vld [vmem:[%s369 + $0x38] sm:$0xff]
        %v846 = vld [vmem:[%s369 + $0x40] sm:$0xff]
        %v847 = vld [vmem:[%s369 + $0x48] sm:$0xff]
        %v848 = vld [vmem:[%s369 + $0x50] sm:$0xff]
        %v849 = vld [vmem:[%s369 + $0x58] sm:$0xff]
        %v850 = vld [vmem:[%s369 + $0x60] sm:$0xff]
        %v851 = vld [vmem:[%s369 + $0x68] sm:$0xff]
        %v852 = vld [vmem:[%s369 + $0x70] sm:$0xff]
        %v853 = vld [vmem:[%s369 + $0x78] sm:$0xff]
        %v854 = vld [vmem:[%s369 + $0x80] sm:$0xff]
        %v855 = vld [vmem:[%s369 + $0x88] sm:$0xff]
        %v856 = vld [vmem:[%s369 + $0x90] sm:$0xff]
        %v857 = vld [vmem:[%s369 + $0x98] sm:$0xff]
        %v858 = vld [vmem:[%s369 + $0xa0] sm:$0xff]
        %v859 = vld [vmem:[%s369 + $0xa8] sm:$0xff]
        %v860 = vld [vmem:[%s369 + $0xb0] sm:$0xff]
        %v861 = vld [vmem:[%s369 + $0xb8] sm:$0xff]
        %v862 = vld [vmem:[%s369 + $0xc0] sm:$0xff]
        %v863 = vld [vmem:[%s369 + $0xc8] sm:$0xff]
        %v864 = vld [vmem:[%s369 + $0xd0] sm:$0xff]
        %v865 = vld [vmem:[%s369 + $0xd8] sm:$0xff]
        %v866 = vld [vmem:[%s369 + $0xe0] sm:$0xff]
        %v867 = vld [vmem:[%s369 + $0xe8] sm:$0xff]
        %v868 = vld [vmem:[%s369 + $0xf0] sm:$0xff]
        %v869 = vld [vmem:[%s369 + $0xf8] sm:$0xff]
        %v870 = vld [vmem:[%s369 + $0x100] sm:$0xff]
        %v871 = vld [vmem:[%s369 + $0x108] sm:$0xff]
        %v872 = vld [vmem:[%s369 + $0x110] sm:$0xff]
        %v873 = vld [vmem:[%s369 + $0x118] sm:$0xff]
        %v874 = vld [vmem:[%s369 + $0x120] sm:$0xff]
        %v875 = vld [vmem:[%s369 + $0x128] sm:$0xff]
        %v876 = vld [vmem:[%s369 + $0x130] sm:$0xff]
        %v877 = vld [vmem:[%s369 + $0x138] sm:$0xff]
        %v878 = vld [vmem:[%s369 + $0x140] sm:$0xff]
        %v879 = vld [vmem:[%s369 + $0x148] sm:$0xff]
        %v880 = vld [vmem:[%s369 + $0x150] sm:$0xff]
        %v881 = vld [vmem:[%s369 + $0x158] sm:$0xff]
        %v882 = vld [vmem:[%s369 + $0x160] sm:$0xff]
        %v883 = vld [vmem:[%s369 + $0x168] sm:$0xff]
        %v884 = vld [vmem:[%s369 + $0x170] sm:$0xff]
        %v885 = vld [vmem:[%s369 + $0x178] sm:$0xff]
        %v886 = vld [vmem:[%s369 + $0x180] sm:$0xff]
        %v887 = vld [vmem:[%s369 + $0x188] sm:$0xff]
        %v888 = vld [vmem:[%s369 + $0x190] sm:$0xff]
        %v889 = vld [vmem:[%s369 + $0x198] sm:$0xff]
        %v890 = vld [vmem:[%s369 + $0x1a0] sm:$0xff]
        %v891 = vld [vmem:[%s369 + $0x1a8] sm:$0xff]
        %v892 = vld [vmem:[%s369 + $0x1b0] sm:$0xff]
        %v893 = vld [vmem:[%s369 + $0x1b8] sm:$0xff]
        %v894 = vld [vmem:[%s369 + $0x1c0] sm:$0xff]
        %v895 = vld [vmem:[%s369 + $0x1c8] sm:$0xff]
        %v896 = vld [vmem:[%s369 + $0x1d0] sm:$0xff]
        %v897 = vld [vmem:[%s369 + $0x1d8] sm:$0xff]
        %v898 = vld [vmem:[%s369 + $0x1e0] sm:$0xff]
        %v899 = vld [vmem:[%s369 + $0x1e8] sm:$0xff]
        %v900 = vld [vmem:[%s369 + $0x1f0] sm:$0xff]
        %v901 = vld [vmem:[%s369 + $0x1f8] sm:$0xff]
        %v902 = vsub.f32 1.0, %v838
        %v903 = vsub.f32 1.0, %v839
        %v904 = vsub.f32 1.0, %v840
        %v905 = vsub.f32 1.0, %v841
        %v906 = vsub.f32 1.0, %v842
        %v907 = vsub.f32 1.0, %v843
        %v908 = vsub.f32 1.0, %v844
        %v909 = vsub.f32 1.0, %v845
        %v910 = vsub.f32 1.0, %v846
        %v911 = vsub.f32 1.0, %v847
        %v912 = vsub.f32 1.0, %v848
        %v913 = vsub.f32 1.0, %v849
        %v914 = vsub.f32 1.0, %v850
        %v915 = vsub.f32 1.0, %v851
        %v916 = vsub.f32 1.0, %v852
        %v917 = vsub.f32 1.0, %v853
        %v918 = vsub.f32 1.0, %v854
        %v919 = vsub.f32 1.0, %v855
        %v920 = vsub.f32 1.0, %v856
        %v921 = vsub.f32 1.0, %v857
        %v922 = vsub.f32 1.0, %v858
        %v923 = vsub.f32 1.0, %v859
        %v924 = vsub.f32 1.0, %v860
        %v925 = vsub.f32 1.0, %v861
        %v926 = vsub.f32 1.0, %v862
        %v927 = vsub.f32 1.0, %v863
        %v928 = vsub.f32 1.0, %v864
        %v929 = vsub.f32 1.0, %v865
        %v930 = vsub.f32 1.0, %v866
        %v931 = vsub.f32 1.0, %v867
        %v932 = vsub.f32 1.0, %v868
        %v933 = vsub.f32 1.0, %v869
        %v934 = vsub.f32 1.0, %v870
        %v935 = vsub.f32 1.0, %v871
        %v936 = vsub.f32 1.0, %v872
        %v937 = vsub.f32 1.0, %v873
        %v938 = vsub.f32 1.0, %v874
        %v939 = vsub.f32 1.0, %v875
        %v940 = vsub.f32 1.0, %v876
        %v941 = vsub.f32 1.0, %v877
        %v942 = vsub.f32 1.0, %v878
        %v943 = vsub.f32 1.0, %v879
        %v944 = vsub.f32 1.0, %v880
        %v945 = vsub.f32 1.0, %v881
        %v946 = vsub.f32 1.0, %v882
        %v947 = vsub.f32 1.0, %v883
        %v948 = vsub.f32 1.0, %v884
        %v949 = vsub.f32 1.0, %v885
        %v950 = vsub.f32 1.0, %v886
        %v951 = vsub.f32 1.0, %v887
        %v952 = vsub.f32 1.0, %v888
        %v953 = vsub.f32 1.0, %v889
        %v954 = vsub.f32 1.0, %v890
        %v955 = vsub.f32 1.0, %v891
        %v956 = vsub.f32 1.0, %v892
        %v957 = vsub.f32 1.0, %v893
        %v958 = vsub.f32 1.0, %v894
        %v959 = vsub.f32 1.0, %v895
        %v960 = vsub.f32 1.0, %v896
        %v961 = vsub.f32 1.0, %v897
        %v962 = vsub.f32 1.0, %v898
        %v963 = vsub.f32 1.0, %v899
        %v964 = vsub.f32 1.0, %v900
        %v965 = vsub.f32 1.0, %v901
        %v966 = vlaneseq
        %v967 = vand.u32 %v966, 127
        %v968 = vld [vmem:[%s359] sm:$0xff]
        %v969 = vld [vmem:[%s359 + $0x8] sm:$0xff]
        %v970 = vld [vmem:[%s359 + $0x10] sm:$0xff]
        %v971 = vld [vmem:[%s359 + $0x18] sm:$0xff]
        %v972 = vld [vmem:[%s359 + $0x20] sm:$0xff]
        %v973 = vld [vmem:[%s359 + $0x28] sm:$0xff]
        %v974 = vld [vmem:[%s359 + $0x30] sm:$0xff]
        %v975 = vld [vmem:[%s359 + $0x38] sm:$0xff]
        %v976 = vld [vmem:[%s359 + $0x40] sm:$0xff]
        %v977 = vld [vmem:[%s359 + $0x48] sm:$0xff]
        %v978 = vld [vmem:[%s359 + $0x50] sm:$0xff]
        %v979 = vld [vmem:[%s359 + $0x58] sm:$0xff]
        %v980 = vld [vmem:[%s359 + $0x60] sm:$0xff]
        %v981 = vld [vmem:[%s359 + $0x68] sm:$0xff]
        %v982 = vld [vmem:[%s359 + $0x70] sm:$0xff]
        %v983 = vld [vmem:[%s359 + $0x78] sm:$0xff]
        %v984 = vld [vmem:[%s359 + $0x80] sm:$0xff]
        %v985 = vld [vmem:[%s359 + $0x88] sm:$0xff]
        %v986 = vld [vmem:[%s359 + $0x90] sm:$0xff]
        %v987 = vld [vmem:[%s359 + $0x98] sm:$0xff]
        %v988 = vld [vmem:[%s359 + $0xa0] sm:$0xff]
        %v989 = vld [vmem:[%s359 + $0xa8] sm:$0xff]
        %v990 = vld [vmem:[%s359 + $0xb0] sm:$0xff]
        %v991 = vld [vmem:[%s359 + $0xb8] sm:$0xff]
        %v992 = vld [vmem:[%s359 + $0xc0] sm:$0xff]
        %v993 = vld [vmem:[%s359 + $0xc8] sm:$0xff]
        %v994 = vld [vmem:[%s359 + $0xd0] sm:$0xff]
        %v995 = vld [vmem:[%s359 + $0xd8] sm:$0xff]
        %v996 = vld [vmem:[%s359 + $0xe0] sm:$0xff]
        %v997 = vld [vmem:[%s359 + $0xe8] sm:$0xff]
        %v998 = vld [vmem:[%s359 + $0xf0] sm:$0xff]
        %v999 = vld [vmem:[%s359 + $0xf8] sm:$0xff]
        %v1000 = vld [vmem:[%s359 + $0x100] sm:$0xff]
        %v1001 = vld [vmem:[%s359 + $0x108] sm:$0xff]
        %v1002 = vld [vmem:[%s359 + $0x110] sm:$0xff]
        %v1003 = vld [vmem:[%s359 + $0x118] sm:$0xff]
        %v1004 = vld [vmem:[%s359 + $0x120] sm:$0xff]
        %v1005 = vld [vmem:[%s359 + $0x128] sm:$0xff]
        %v1006 = vld [vmem:[%s359 + $0x130] sm:$0xff]
        %v1007 = vld [vmem:[%s359 + $0x138] sm:$0xff]
        %v1008 = vld [vmem:[%s359 + $0x140] sm:$0xff]
        %v1009 = vld [vmem:[%s359 + $0x148] sm:$0xff]
        %v1010 = vld [vmem:[%s359 + $0x150] sm:$0xff]
        %v1011 = vld [vmem:[%s359 + $0x158] sm:$0xff]
        %v1012 = vld [vmem:[%s359 + $0x160] sm:$0xff]
        %v1013 = vld [vmem:[%s359 + $0x168] sm:$0xff]
        %v1014 = vld [vmem:[%s359 + $0x170] sm:$0xff]
        %v1015 = vld [vmem:[%s359 + $0x178] sm:$0xff]
        %v1016 = vld [vmem:[%s359 + $0x180] sm:$0xff]
        %v1017 = vld [vmem:[%s359 + $0x188] sm:$0xff]
        %v1018 = vld [vmem:[%s359 + $0x190] sm:$0xff]
        %v1019 = vld [vmem:[%s359 + $0x198] sm:$0xff]
        %v1020 = vld [vmem:[%s359 + $0x1a0] sm:$0xff]
        %v1021 = vld [vmem:[%s359 + $0x1a8] sm:$0xff]
        %v1022 = vld [vmem:[%s359 + $0x1b0] sm:$0xff]
        %v1023 = vld [vmem:[%s359 + $0x1b8] sm:$0xff]
        %v1024 = vld [vmem:[%s359 + $0x1c0] sm:$0xff]
        %v1025 = vld [vmem:[%s359 + $0x1c8] sm:$0xff]
        %v1026 = vld [vmem:[%s359 + $0x1d0] sm:$0xff]
        %v1027 = vld [vmem:[%s359 + $0x1d8] sm:$0xff]
        %v1028 = vld [vmem:[%s359 + $0x1e0] sm:$0xff]
        %v1029 = vld [vmem:[%s359 + $0x1e8] sm:$0xff]
        %v1030 = vld [vmem:[%s359 + $0x1f0] sm:$0xff]
        %v1031 = vld [vmem:[%s359 + $0x1f8] sm:$0xff]
        %1032 = vset.pattern.permute.xlu0 0
        %1033 = vperm.xlu0 %1032, %v968
        %v1034 = vpop.permute.xlu0 %1033
        %1035 = vset.pattern.permute.xlu0 0
        %1036 = vperm.xlu0 %1035, %v969
        %v1037 = vpop.permute.xlu0 %1036
        %1038 = vset.pattern.permute.xlu0 0
        %1039 = vperm.xlu0 %1038, %v970
        %v1040 = vpop.permute.xlu0 %1039
        %1041 = vset.pattern.permute.xlu0 0
        %1042 = vperm.xlu0 %1041, %v971
        %v1043 = vpop.permute.xlu0 %1042
        %1044 = vset.pattern.permute.xlu0 0
        %1045 = vperm.xlu0 %1044, %v972
        %v1046 = vpop.permute.xlu0 %1045
        %1047 = vset.pattern.permute.xlu0 0
        %1048 = vperm.xlu0 %1047, %v973
        %v1049 = vpop.permute.xlu0 %1048
        %1050 = vset.pattern.permute.xlu0 0
        %1051 = vperm.xlu0 %1050, %v974
        %v1052 = vpop.permute.xlu0 %1051
        %1053 = vset.pattern.permute.xlu0 0
        %1054 = vperm.xlu0 %1053, %v975
        %v1055 = vpop.permute.xlu0 %1054
        %1056 = vset.pattern.permute.xlu0 0
        %1057 = vperm.xlu0 %1056, %v976
        %v1058 = vpop.permute.xlu0 %1057
        %1059 = vset.pattern.permute.xlu0 0
        %1060 = vperm.xlu0 %1059, %v977
        %v1061 = vpop.permute.xlu0 %1060
        %1062 = vset.pattern.permute.xlu0 0
        %1063 = vperm.xlu0 %1062, %v978
        %v1064 = vpop.permute.xlu0 %1063
        %1065 = vset.pattern.permute.xlu0 0
        %1066 = vperm.xlu0 %1065, %v979
        %v1067 = vpop.permute.xlu0 %1066
        %1068 = vset.pattern.permute.xlu0 0
        %1069 = vperm.xlu0 %1068, %v980
        %v1070 = vpop.permute.xlu0 %1069
        %1071 = vset.pattern.permute.xlu0 0
        %1072 = vperm.xlu0 %1071, %v981
        %v1073 = vpop.permute.xlu0 %1072
        %1074 = vset.pattern.permute.xlu0 0
        %1075 = vperm.xlu0 %1074, %v982
        %v1076 = vpop.permute.xlu0 %1075
        %1077 = vset.pattern.permute.xlu0 0
        %1078 = vperm.xlu0 %1077, %v983
        %v1079 = vpop.permute.xlu0 %1078
        %1080 = vset.pattern.permute.xlu0 0
        %1081 = vperm.xlu0 %1080, %v984
        %v1082 = vpop.permute.xlu0 %1081
        %1083 = vset.pattern.permute.xlu0 0
        %1084 = vperm.xlu0 %1083, %v985
        %v1085 = vpop.permute.xlu0 %1084
        %1086 = vset.pattern.permute.xlu0 0
        %1087 = vperm.xlu0 %1086, %v986
        %v1088 = vpop.permute.xlu0 %1087
        %1089 = vset.pattern.permute.xlu0 0
        %1090 = vperm.xlu0 %1089, %v987
        %v1091 = vpop.permute.xlu0 %1090
        %1092 = vset.pattern.permute.xlu0 0
        %1093 = vperm.xlu0 %1092, %v988
        %v1094 = vpop.permute.xlu0 %1093
        %1095 = vset.pattern.permute.xlu0 0
        %1096 = vperm.xlu0 %1095, %v989
        %v1097 = vpop.permute.xlu0 %1096
        %1098 = vset.pattern.permute.xlu0 0
        %1099 = vperm.xlu0 %1098, %v990
        %v1100 = vpop.permute.xlu0 %1099
        %1101 = vset.pattern.permute.xlu0 0
        %1102 = vperm.xlu0 %1101, %v991
        %v1103 = vpop.permute.xlu0 %1102
        %1104 = vset.pattern.permute.xlu0 0
        %1105 = vperm.xlu0 %1104, %v992
        %v1106 = vpop.permute.xlu0 %1105
        %1107 = vset.pattern.permute.xlu0 0
        %1108 = vperm.xlu0 %1107, %v993
        %v1109 = vpop.permute.xlu0 %1108
        %1110 = vset.pattern.permute.xlu0 0
        %1111 = vperm.xlu0 %1110, %v994
        %v1112 = vpop.permute.xlu0 %1111
        %1113 = vset.pattern.permute.xlu0 0
        %1114 = vperm.xlu0 %1113, %v995
        %v1115 = vpop.permute.xlu0 %1114
        %1116 = vset.pattern.permute.xlu0 0
        %1117 = vperm.xlu0 %1116, %v996
        %v1118 = vpop.permute.xlu0 %1117
        %1119 = vset.pattern.permute.xlu0 0
        %1120 = vperm.xlu0 %1119, %v997
        %v1121 = vpop.permute.xlu0 %1120
        %1122 = vset.pattern.permute.xlu0 0
        %1123 = vperm.xlu0 %1122, %v998
        %v1124 = vpop.permute.xlu0 %1123
        %1125 = vset.pattern.permute.xlu0 0
        %1126 = vperm.xlu0 %1125, %v999
        %v1127 = vpop.permute.xlu0 %1126
        %1128 = vset.pattern.permute.xlu0 0
        %1129 = vperm.xlu0 %1128, %v1000
        %v1130 = vpop.permute.xlu0 %1129
        %1131 = vset.pattern.permute.xlu0 0
        %1132 = vperm.xlu0 %1131, %v1001
        %v1133 = vpop.permute.xlu0 %1132
        %1134 = vset.pattern.permute.xlu0 0
        %1135 = vperm.xlu0 %1134, %v1002
        %v1136 = vpop.permute.xlu0 %1135
        %1137 = vset.pattern.permute.xlu0 0
        %1138 = vperm.xlu0 %1137, %v1003
        %v1139 = vpop.permute.xlu0 %1138
        %1140 = vset.pattern.permute.xlu0 0
        %1141 = vperm.xlu0 %1140, %v1004
        %v1142 = vpop.permute.xlu0 %1141
        %1143 = vset.pattern.permute.xlu0 0
        %1144 = vperm.xlu0 %1143, %v1005
        %v1145 = vpop.permute.xlu0 %1144
        %1146 = vset.pattern.permute.xlu0 0
        %1147 = vperm.xlu0 %1146, %v1006
        %v1148 = vpop.permute.xlu0 %1147
        %1149 = vset.pattern.permute.xlu0 0
        %1150 = vperm.xlu0 %1149, %v1007
        %v1151 = vpop.permute.xlu0 %1150
        %1152 = vset.pattern.permute.xlu0 0
        %1153 = vperm.xlu0 %1152, %v1008
        %v1154 = vpop.permute.xlu0 %1153
        %1155 = vset.pattern.permute.xlu0 0
        %1156 = vperm.xlu0 %1155, %v1009
        %v1157 = vpop.permute.xlu0 %1156
        %1158 = vset.pattern.permute.xlu0 0
        %1159 = vperm.xlu0 %1158, %v1010
        %v1160 = vpop.permute.xlu0 %1159
        %1161 = vset.pattern.permute.xlu0 0
        %1162 = vperm.xlu0 %1161, %v1011
        %v1163 = vpop.permute.xlu0 %1162
        %1164 = vset.pattern.permute.xlu0 0
        %1165 = vperm.xlu0 %1164, %v1012
        %v1166 = vpop.permute.xlu0 %1165
        %1167 = vset.pattern.permute.xlu0 0
        %1168 = vperm.xlu0 %1167, %v1013
        %v1169 = vpop.permute.xlu0 %1168
        %1170 = vset.pattern.permute.xlu0 0
        %1171 = vperm.xlu0 %1170, %v1014
        %v1172 = vpop.permute.xlu0 %1171
        %1173 = vset.pattern.permute.xlu0 0
        %1174 = vperm.xlu0 %1173, %v1015
        %v1175 = vpop.permute.xlu0 %1174
        %1176 = vset.pattern.permute.xlu0 0
        %1177 = vperm.xlu0 %1176, %v1016
        %v1178 = vpop.permute.xlu0 %1177
        %1179 = vset.pattern.permute.xlu0 0
        %1180 = vperm.xlu0 %1179, %v1017
        %v1181 = vpop.permute.xlu0 %1180
        %1182 = vset.pattern.permute.xlu0 0
        %1183 = vperm.xlu0 %1182, %v1018
        %v1184 = vpop.permute.xlu0 %1183
        %1185 = vset.pattern.permute.xlu0 0
        %1186 = vperm.xlu0 %1185, %v1019
        %v1187 = vpop.permute.xlu0 %1186
        %1188 = vset.pattern.permute.xlu0 0
        %1189 = vperm.xlu0 %1188, %v1020
        %v1190 = vpop.permute.xlu0 %1189
        %1191 = vset.pattern.permute.xlu0 0
        %1192 = vperm.xlu0 %1191, %v1021
        %v1193 = vpop.permute.xlu0 %1192
        %1194 = vset.pattern.permute.xlu0 0
        %1195 = vperm.xlu0 %1194, %v1022
        %v1196 = vpop.permute.xlu0 %1195
        %1197 = vset.pattern.permute.xlu0 0
        %1198 = vperm.xlu0 %1197, %v1023
        %v1199 = vpop.permute.xlu0 %1198
        %1200 = vset.pattern.permute.xlu0 0
        %1201 = vperm.xlu0 %1200, %v1024
        %v1202 = vpop.permute.xlu0 %1201
        %1203 = vset.pattern.permute.xlu0 0
        %1204 = vperm.xlu0 %1203, %v1025
        %v1205 = vpop.permute.xlu0 %1204
        %1206 = vset.pattern.permute.xlu0 0
        %1207 = vperm.xlu0 %1206, %v1026
        %v1208 = vpop.permute.xlu0 %1207
        %1209 = vset.pattern.permute.xlu0 0
        %1210 = vperm.xlu0 %1209, %v1027
        %v1211 = vpop.permute.xlu0 %1210
        %1212 = vset.pattern.permute.xlu0 0
        %1213 = vperm.xlu0 %1212, %v1028
        %v1214 = vpop.permute.xlu0 %1213
        %1215 = vset.pattern.permute.xlu0 0
        %1216 = vperm.xlu0 %1215, %v1029
        %v1217 = vpop.permute.xlu0 %1216
        %1218 = vset.pattern.permute.xlu0 0
        %1219 = vperm.xlu0 %1218, %v1030
        %v1220 = vpop.permute.xlu0 %1219
        %1221 = vset.pattern.permute.xlu0 0
        %1222 = vperm.xlu0 %1221, %v1031
        %v1223 = vpop.permute.xlu0 %1222
        %vm1224 = vcmp.eq.s32.totalorder %v1034, %v967
        %vm1225 = vcmp.eq.s32.totalorder %v1037, %v967
        %vm1226 = vcmp.eq.s32.totalorder %v1040, %v967
        %vm1227 = vcmp.eq.s32.totalorder %v1043, %v967
        %vm1228 = vcmp.eq.s32.totalorder %v1046, %v967
        %vm1229 = vcmp.eq.s32.totalorder %v1049, %v967
        %vm1230 = vcmp.eq.s32.totalorder %v1052, %v967
        %vm1231 = vcmp.eq.s32.totalorder %v1055, %v967
        %vm1232 = vcmp.eq.s32.totalorder %v1058, %v967
        %vm1233 = vcmp.eq.s32.totalorder %v1061, %v967
        %vm1234 = vcmp.eq.s32.totalorder %v1064, %v967
        %vm1235 = vcmp.eq.s32.totalorder %v1067, %v967
        %vm1236 = vcmp.eq.s32.totalorder %v1070, %v967
        %vm1237 = vcmp.eq.s32.totalorder %v1073, %v967
        %vm1238 = vcmp.eq.s32.totalorder %v1076, %v967
        %vm1239 = vcmp.eq.s32.totalorder %v1079, %v967
        %vm1240 = vcmp.eq.s32.totalorder %v1082, %v967
        %vm1241 = vcmp.eq.s32.totalorder %v1085, %v967
        %vm1242 = vcmp.eq.s32.totalorder %v1088, %v967
        %vm1243 = vcmp.eq.s32.totalorder %v1091, %v967
        %vm1244 = vcmp.eq.s32.totalorder %v1094, %v967
        %vm1245 = vcmp.eq.s32.totalorder %v1097, %v967
        %vm1246 = vcmp.eq.s32.totalorder %v1100, %v967
        %vm1247 = vcmp.eq.s32.totalorder %v1103, %v967
        %vm1248 = vcmp.eq.s32.totalorder %v1106, %v967
        %vm1249 = vcmp.eq.s32.totalorder %v1109, %v967
        %vm1250 = vcmp.eq.s32.totalorder %v1112, %v967
        %vm1251 = vcmp.eq.s32.totalorder %v1115, %v967
        %vm1252 = vcmp.eq.s32.totalorder %v1118, %v967
        %vm1253 = vcmp.eq.s32.totalorder %v1121, %v967
        %vm1254 = vcmp.eq.s32.totalorder %v1124, %v967
        %vm1255 = vcmp.eq.s32.totalorder %v1127, %v967
        %vm1256 = vcmp.eq.s32.totalorder %v1130, %v967
        %vm1257 = vcmp.eq.s32.totalorder %v1133, %v967
        %vm1258 = vcmp.eq.s32.totalorder %v1136, %v967
        %vm1259 = vcmp.eq.s32.totalorder %v1139, %v967
        %vm1260 = vcmp.eq.s32.totalorder %v1142, %v967
        %vm1261 = vcmp.eq.s32.totalorder %v1145, %v967
        %vm1262 = vcmp.eq.s32.totalorder %v1148, %v967
        %vm1263 = vcmp.eq.s32.totalorder %v1151, %v967
        %vm1264 = vcmp.eq.s32.totalorder %v1154, %v967
        %vm1265 = vcmp.eq.s32.totalorder %v1157, %v967
        %vm1266 = vcmp.eq.s32.totalorder %v1160, %v967
        %vm1267 = vcmp.eq.s32.totalorder %v1163, %v967
        %vm1268 = vcmp.eq.s32.totalorder %v1166, %v967
        %vm1269 = vcmp.eq.s32.totalorder %v1169, %v967
        %vm1270 = vcmp.eq.s32.totalorder %v1172, %v967
        %vm1271 = vcmp.eq.s32.totalorder %v1175, %v967
        %vm1272 = vcmp.eq.s32.totalorder %v1178, %v967
        %vm1273 = vcmp.eq.s32.totalorder %v1181, %v967
        %vm1274 = vcmp.eq.s32.totalorder %v1184, %v967
        %vm1275 = vcmp.eq.s32.totalorder %v1187, %v967
        %vm1276 = vcmp.eq.s32.totalorder %v1190, %v967
        %vm1277 = vcmp.eq.s32.totalorder %v1193, %v967
        %vm1278 = vcmp.eq.s32.totalorder %v1196, %v967
        %vm1279 = vcmp.eq.s32.totalorder %v1199, %v967
        %vm1280 = vcmp.eq.s32.totalorder %v1202, %v967
        %vm1281 = vcmp.eq.s32.totalorder %v1205, %v967
        %vm1282 = vcmp.eq.s32.totalorder %v1208, %v967
        %vm1283 = vcmp.eq.s32.totalorder %v1211, %v967
        %vm1284 = vcmp.eq.s32.totalorder %v1214, %v967
        %vm1285 = vcmp.eq.s32.totalorder %v1217, %v967
        %vm1286 = vcmp.eq.s32.totalorder %v1220, %v967
        %vm1287 = vcmp.eq.s32.totalorder %v1223, %v967
        %v1288 = vmul.f32 %v583, %v902
        %v1289 = vmul.f32 %v586, %v903
        %v1290 = vmul.f32 %v589, %v904
        %v1291 = vmul.f32 %v592, %v905
        %v1292 = vmul.f32 %v595, %v906
        %v1293 = vmul.f32 %v598, %v907
        %v1294 = vmul.f32 %v601, %v908
        %v1295 = vmul.f32 %v604, %v909
        %v1296 = vmul.f32 %v607, %v910
        %v1297 = vmul.f32 %v610, %v911
        %v1298 = vmul.f32 %v613, %v912
        %v1299 = vmul.f32 %v616, %v913
        %v1300 = vmul.f32 %v619, %v914
        %v1301 = vmul.f32 %v622, %v915
        %v1302 = vmul.f32 %v625, %v916
        %v1303 = vmul.f32 %v628, %v917
        %v1304 = vmul.f32 %v631, %v918
        %v1305 = vmul.f32 %v634, %v919
        %v1306 = vmul.f32 %v637, %v920
        %v1307 = vmul.f32 %v640, %v921
        %v1308 = vmul.f32 %v643, %v922
        %v1309 = vmul.f32 %v646, %v923
        %v1310 = vmul.f32 %v649, %v924
        %v1311 = vmul.f32 %v652, %v925
        %v1312 = vmul.f32 %v655, %v926
        %v1313 = vmul.f32 %v658, %v927
        %v1314 = vmul.f32 %v661, %v928
        %v1315 = vmul.f32 %v664, %v929
        %v1316 = vmul.f32 %v667, %v930
        %v1317 = vmul.f32 %v670, %v931
        %v1318 = vmul.f32 %v673, %v932
        %v1319 = vmul.f32 %v676, %v933
        %v1320 = vmul.f32 %v679, %v934
        %v1321 = vmul.f32 %v682, %v935
        %v1322 = vmul.f32 %v685, %v936
        %v1323 = vmul.f32 %v688, %v937
        %v1324 = vmul.f32 %v691, %v938
        %v1325 = vmul.f32 %v694, %v939
        %v1326 = vmul.f32 %v697, %v940
        %v1327 = vmul.f32 %v700, %v941
        %v1328 = vmul.f32 %v703, %v942
        %v1329 = vmul.f32 %v706, %v943
        %v1330 = vmul.f32 %v709, %v944
        %v1331 = vmul.f32 %v712, %v945
        %v1332 = vmul.f32 %v715, %v946
        %v1333 = vmul.f32 %v718, %v947
        %v1334 = vmul.f32 %v721, %v948
        %v1335 = vmul.f32 %v724, %v949
        %v1336 = vmul.f32 %v727, %v950
        %v1337 = vmul.f32 %v730, %v951
        %v1338 = vmul.f32 %v733, %v952
        %v1339 = vmul.f32 %v736, %v953
        %v1340 = vmul.f32 %v739, %v954
        %v1341 = vmul.f32 %v742, %v955
        %v1342 = vmul.f32 %v745, %v956
        %v1343 = vmul.f32 %v748, %v957
        %v1344 = vmul.f32 %v751, %v958
        %v1345 = vmul.f32 %v754, %v959
        %v1346 = vmul.f32 %v757, %v960
        %v1347 = vmul.f32 %v760, %v961
        %v1348 = vmul.f32 %v763, %v962
        %v1349 = vmul.f32 %v766, %v963
        %v1350 = vmul.f32 %v769, %v964
        %v1351 = vmul.f32 %v772, %v965
        %1353 = vset.pattern.permute.xlu0 0
        %1354 = vperm.xlu0 %1353, %v1288
        %v1355 = vpop.permute.xlu0 %1354
        %1358 = vset.pattern.permute.xlu0 0
        %1359 = vperm.xlu0 %1358, %v1289
        %v1360 = vpop.permute.xlu0 %1359
        %1363 = vset.pattern.permute.xlu0 0
        %1364 = vperm.xlu0 %1363, %v1290
        %v1365 = vpop.permute.xlu0 %1364
        %1368 = vset.pattern.permute.xlu0 0
        %1369 = vperm.xlu0 %1368, %v1291
        %v1370 = vpop.permute.xlu0 %1369
        %1373 = vset.pattern.permute.xlu0 0
        %1374 = vperm.xlu0 %1373, %v1292
        %v1375 = vpop.permute.xlu0 %1374
        %1378 = vset.pattern.permute.xlu0 0
        %1379 = vperm.xlu0 %1378, %v1293
        %v1380 = vpop.permute.xlu0 %1379
        %1383 = vset.pattern.permute.xlu0 0
        %1384 = vperm.xlu0 %1383, %v1294
        %v1385 = vpop.permute.xlu0 %1384
        %1388 = vset.pattern.permute.xlu0 0
        %1389 = vperm.xlu0 %1388, %v1295
        %v1390 = vpop.permute.xlu0 %1389
        %1393 = vset.pattern.permute.xlu0 0
        %1394 = vperm.xlu0 %1393, %v1296
        %v1395 = vpop.permute.xlu0 %1394
        %1398 = vset.pattern.permute.xlu0 0
        %1399 = vperm.xlu0 %1398, %v1297
        %v1400 = vpop.permute.xlu0 %1399
        %1403 = vset.pattern.permute.xlu0 0
        %1404 = vperm.xlu0 %1403, %v1298
        %v1405 = vpop.permute.xlu0 %1404
        %1408 = vset.pattern.permute.xlu0 0
        %1409 = vperm.xlu0 %1408, %v1299
        %v1410 = vpop.permute.xlu0 %1409
        %1413 = vset.pattern.permute.xlu0 0
        %1414 = vperm.xlu0 %1413, %v1300
        %v1415 = vpop.permute.xlu0 %1414
        %1418 = vset.pattern.permute.xlu0 0
        %1419 = vperm.xlu0 %1418, %v1301
        %v1420 = vpop.permute.xlu0 %1419
        %1423 = vset.pattern.permute.xlu0 0
        %1424 = vperm.xlu0 %1423, %v1302
        %v1425 = vpop.permute.xlu0 %1424
        %1428 = vset.pattern.permute.xlu0 0
        %1429 = vperm.xlu0 %1428, %v1303
        %v1430 = vpop.permute.xlu0 %1429
        %1433 = vset.pattern.permute.xlu0 0
        %1434 = vperm.xlu0 %1433, %v1304
        %v1435 = vpop.permute.xlu0 %1434
        %1438 = vset.pattern.permute.xlu0 0
        %1439 = vperm.xlu0 %1438, %v1305
        %v1440 = vpop.permute.xlu0 %1439
        %1443 = vset.pattern.permute.xlu0 0
        %1444 = vperm.xlu0 %1443, %v1306
        %v1445 = vpop.permute.xlu0 %1444
        %1448 = vset.pattern.permute.xlu0 0
        %1449 = vperm.xlu0 %1448, %v1307
        %v1450 = vpop.permute.xlu0 %1449
        %1453 = vset.pattern.permute.xlu0 0
        %1454 = vperm.xlu0 %1453, %v1308
        %v1455 = vpop.permute.xlu0 %1454
        %1458 = vset.pattern.permute.xlu0 0
        %1459 = vperm.xlu0 %1458, %v1309
        %v1460 = vpop.permute.xlu0 %1459
        %1463 = vset.pattern.permute.xlu0 0
        %1464 = vperm.xlu0 %1463, %v1310
        %v1465 = vpop.permute.xlu0 %1464
        %1468 = vset.pattern.permute.xlu0 0
        %1469 = vperm.xlu0 %1468, %v1311
        %v1470 = vpop.permute.xlu0 %1469
        %1473 = vset.pattern.permute.xlu0 0
        %1474 = vperm.xlu0 %1473, %v1312
        %v1475 = vpop.permute.xlu0 %1474
        %1478 = vset.pattern.permute.xlu0 0
        %1479 = vperm.xlu0 %1478, %v1313
        %v1480 = vpop.permute.xlu0 %1479
        %1483 = vset.pattern.permute.xlu0 0
        %1484 = vperm.xlu0 %1483, %v1314
        %v1485 = vpop.permute.xlu0 %1484
        %1488 = vset.pattern.permute.xlu0 0
        %1489 = vperm.xlu0 %1488, %v1315
        %v1490 = vpop.permute.xlu0 %1489
        %1493 = vset.pattern.permute.xlu0 0
        %1494 = vperm.xlu0 %1493, %v1316
        %v1495 = vpop.permute.xlu0 %1494
        %1498 = vset.pattern.permute.xlu0 0
        %1499 = vperm.xlu0 %1498, %v1317
        %v1500 = vpop.permute.xlu0 %1499
        %1503 = vset.pattern.permute.xlu0 0
        %1504 = vperm.xlu0 %1503, %v1318
        %v1505 = vpop.permute.xlu0 %1504
        %1508 = vset.pattern.permute.xlu0 0
        %1509 = vperm.xlu0 %1508, %v1319
        %v1510 = vpop.permute.xlu0 %1509
        %1513 = vset.pattern.permute.xlu0 0
        %1514 = vperm.xlu0 %1513, %v1320
        %v1515 = vpop.permute.xlu0 %1514
        %1518 = vset.pattern.permute.xlu0 0
        %1519 = vperm.xlu0 %1518, %v1321
        %v1520 = vpop.permute.xlu0 %1519
        %1523 = vset.pattern.permute.xlu0 0
        %1524 = vperm.xlu0 %1523, %v1322
        %v1525 = vpop.permute.xlu0 %1524
        %1528 = vset.pattern.permute.xlu0 0
        %1529 = vperm.xlu0 %1528, %v1323
        %v1530 = vpop.permute.xlu0 %1529
        %1533 = vset.pattern.permute.xlu0 0
        %1534 = vperm.xlu0 %1533, %v1324
        %v1535 = vpop.permute.xlu0 %1534
        %1538 = vset.pattern.permute.xlu0 0
        %1539 = vperm.xlu0 %1538, %v1325
        %v1540 = vpop.permute.xlu0 %1539
        %1543 = vset.pattern.permute.xlu0 0
        %1544 = vperm.xlu0 %1543, %v1326
        %v1545 = vpop.permute.xlu0 %1544
        %1548 = vset.pattern.permute.xlu0 0
        %1549 = vperm.xlu0 %1548, %v1327
        %v1550 = vpop.permute.xlu0 %1549
        %1553 = vset.pattern.permute.xlu0 0
        %1554 = vperm.xlu0 %1553, %v1328
        %v1555 = vpop.permute.xlu0 %1554
        %1558 = vset.pattern.permute.xlu0 0
        %1559 = vperm.xlu0 %1558, %v1329
        %v1560 = vpop.permute.xlu0 %1559
        %1563 = vset.pattern.permute.xlu0 0
        %1564 = vperm.xlu0 %1563, %v1330
        %v1565 = vpop.permute.xlu0 %1564
        %1568 = vset.pattern.permute.xlu0 0
        %1569 = vperm.xlu0 %1568, %v1331
        %v1570 = vpop.permute.xlu0 %1569
        %1573 = vset.pattern.permute.xlu0 0
        %1574 = vperm.xlu0 %1573, %v1332
        %v1575 = vpop.permute.xlu0 %1574
        %1578 = vset.pattern.permute.xlu0 0
        %1579 = vperm.xlu0 %1578, %v1333
        %v1580 = vpop.permute.xlu0 %1579
        %1583 = vset.pattern.permute.xlu0 0
        %1584 = vperm.xlu0 %1583, %v1334
        %v1585 = vpop.permute.xlu0 %1584
        %1588 = vset.pattern.permute.xlu0 0
        %1589 = vperm.xlu0 %1588, %v1335
        %v1590 = vpop.permute.xlu0 %1589
        %1593 = vset.pattern.permute.xlu0 0
        %1594 = vperm.xlu0 %1593, %v1336
        %v1595 = vpop.permute.xlu0 %1594
        %1598 = vset.pattern.permute.xlu0 0
        %1599 = vperm.xlu0 %1598, %v1337
        %v1600 = vpop.permute.xlu0 %1599
        %1603 = vset.pattern.permute.xlu0 0
        %1604 = vperm.xlu0 %1603, %v1338
        %v1605 = vpop.permute.xlu0 %1604
        %1608 = vset.pattern.permute.xlu0 0
        %1609 = vperm.xlu0 %1608, %v1339
        %v1610 = vpop.permute.xlu0 %1609
        %1613 = vset.pattern.permute.xlu0 0
        %1614 = vperm.xlu0 %1613, %v1340
        %v1615 = vpop.permute.xlu0 %1614
        %1618 = vset.pattern.permute.xlu0 0
        %1619 = vperm.xlu0 %1618, %v1341
        %v1620 = vpop.permute.xlu0 %1619
        %1623 = vset.pattern.permute.xlu0 0
        %1624 = vperm.xlu0 %1623, %v1342
        %v1625 = vpop.permute.xlu0 %1624
        %1628 = vset.pattern.permute.xlu0 0
        %1629 = vperm.xlu0 %1628, %v1343
        %v1630 = vpop.permute.xlu0 %1629
        %1633 = vset.pattern.permute.xlu0 0
        %1634 = vperm.xlu0 %1633, %v1344
        %v1635 = vpop.permute.xlu0 %1634
        %1638 = vset.pattern.permute.xlu0 0
        %1639 = vperm.xlu0 %1638, %v1345
        %v1640 = vpop.permute.xlu0 %1639
        %1643 = vset.pattern.permute.xlu0 0
        %1644 = vperm.xlu0 %1643, %v1346
        %v1645 = vpop.permute.xlu0 %1644
        %1648 = vset.pattern.permute.xlu0 0
        %1649 = vperm.xlu0 %1648, %v1347
        %v1650 = vpop.permute.xlu0 %1649
        %1653 = vset.pattern.permute.xlu0 0
        %1654 = vperm.xlu0 %1653, %v1348
        %v1655 = vpop.permute.xlu0 %1654
        %1658 = vset.pattern.permute.xlu0 0
        %1659 = vperm.xlu0 %1658, %v1349
        %v1660 = vpop.permute.xlu0 %1659
        %1663 = vset.pattern.permute.xlu0 0
        %1664 = vperm.xlu0 %1663, %v1350
        %v1665 = vpop.permute.xlu0 %1664
        %1668 = vset.pattern.permute.xlu0 0
        %1669 = vperm.xlu0 %1668, %v1351
        %v1670 = vpop.permute.xlu0 %1669
        %v1672 = vsel %vm1224, %v1355, 0.0
        %v1673 = vsel %vm1225, %v1360, 0.0
        %v1674 = vsel %vm1226, %v1365, 0.0
        %v1675 = vsel %vm1227, %v1370, 0.0
        %v1676 = vsel %vm1228, %v1375, 0.0
        %v1677 = vsel %vm1229, %v1380, 0.0
        %v1678 = vsel %vm1230, %v1385, 0.0
        %v1679 = vsel %vm1231, %v1390, 0.0
        %v1680 = vsel %vm1232, %v1395, 0.0
        %v1681 = vsel %vm1233, %v1400, 0.0
        %v1682 = vsel %vm1234, %v1405, 0.0
        %v1683 = vsel %vm1235, %v1410, 0.0
        %v1684 = vsel %vm1236, %v1415, 0.0
        %v1685 = vsel %vm1237, %v1420, 0.0
        %v1686 = vsel %vm1238, %v1425, 0.0
        %v1687 = vsel %vm1239, %v1430, 0.0
        %v1688 = vsel %vm1240, %v1435, 0.0
        %v1689 = vsel %vm1241, %v1440, 0.0
        %v1690 = vsel %vm1242, %v1445, 0.0
        %v1691 = vsel %vm1243, %v1450, 0.0
        %v1692 = vsel %vm1244, %v1455, 0.0
        %v1693 = vsel %vm1245, %v1460, 0.0
        %v1694 = vsel %vm1246, %v1465, 0.0
        %v1695 = vsel %vm1247, %v1470, 0.0
        %v1696 = vsel %vm1248, %v1475, 0.0
        %v1697 = vsel %vm1249, %v1480, 0.0
        %v1698 = vsel %vm1250, %v1485, 0.0
        %v1699 = vsel %vm1251, %v1490, 0.0
        %v1700 = vsel %vm1252, %v1495, 0.0
        %v1701 = vsel %vm1253, %v1500, 0.0
        %v1702 = vsel %vm1254, %v1505, 0.0
        %v1703 = vsel %vm1255, %v1510, 0.0
        %v1704 = vsel %vm1256, %v1515, 0.0
        %v1705 = vsel %vm1257, %v1520, 0.0
        %v1706 = vsel %vm1258, %v1525, 0.0
        %v1707 = vsel %vm1259, %v1530, 0.0
        %v1708 = vsel %vm1260, %v1535, 0.0
        %v1709 = vsel %vm1261, %v1540, 0.0
        %v1710 = vsel %vm1262, %v1545, 0.0
        %v1711 = vsel %vm1263, %v1550, 0.0
        %v1712 = vsel %vm1264, %v1555, 0.0
        %v1713 = vsel %vm1265, %v1560, 0.0
        %v1714 = vsel %vm1266, %v1565, 0.0
        %v1715 = vsel %vm1267, %v1570, 0.0
        %v1716 = vsel %vm1268, %v1575, 0.0
        %v1717 = vsel %vm1269, %v1580, 0.0
        %v1718 = vsel %vm1270, %v1585, 0.0
        %v1719 = vsel %vm1271, %v1590, 0.0
        %v1720 = vsel %vm1272, %v1595, 0.0
        %v1721 = vsel %vm1273, %v1600, 0.0
        %v1722 = vsel %vm1274, %v1605, 0.0
        %v1723 = vsel %vm1275, %v1610, 0.0
        %v1724 = vsel %vm1276, %v1615, 0.0
        %v1725 = vsel %vm1277, %v1620, 0.0
        %v1726 = vsel %vm1278, %v1625, 0.0
        %v1727 = vsel %vm1279, %v1630, 0.0
        %v1728 = vsel %vm1280, %v1635, 0.0
        %v1729 = vsel %vm1281, %v1640, 0.0
        %v1730 = vsel %vm1282, %v1645, 0.0
        %v1731 = vsel %vm1283, %v1650, 0.0
        %v1732 = vsel %vm1284, %v1655, 0.0
        %v1733 = vsel %vm1285, %v1660, 0.0
        %v1734 = vsel %vm1286, %v1665, 0.0
        %v1735 = vsel %vm1287, %v1670, 0.0
        %v1736 = vadd.f32 %v1672, %v1673
        %v1737 = vadd.f32 %v1736, %v1674
        %v1738 = vadd.f32 %v1737, %v1675
        %v1739 = vadd.f32 %v1738, %v1676
        %v1740 = vadd.f32 %v1739, %v1677
        %v1741 = vadd.f32 %v1740, %v1678
        %v1742 = vadd.f32 %v1741, %v1679
        %v1743 = vadd.f32 %v1742, %v1680
        %v1744 = vadd.f32 %v1743, %v1681
        %v1745 = vadd.f32 %v1744, %v1682
        %v1746 = vadd.f32 %v1745, %v1683
        %v1747 = vadd.f32 %v1746, %v1684
        %v1748 = vadd.f32 %v1747, %v1685
        %v1749 = vadd.f32 %v1748, %v1686
        %v1750 = vadd.f32 %v1749, %v1687
        %v1751 = vadd.f32 %v1750, %v1688
        %v1752 = vadd.f32 %v1751, %v1689
        %v1753 = vadd.f32 %v1752, %v1690
        %v1754 = vadd.f32 %v1753, %v1691
        %v1755 = vadd.f32 %v1754, %v1692
        %v1756 = vadd.f32 %v1755, %v1693
        %v1757 = vadd.f32 %v1756, %v1694
        %v1758 = vadd.f32 %v1757, %v1695
        %v1759 = vadd.f32 %v1758, %v1696
        %v1760 = vadd.f32 %v1759, %v1697
        %v1761 = vadd.f32 %v1760, %v1698
        %v1762 = vadd.f32 %v1761, %v1699
        %v1763 = vadd.f32 %v1762, %v1700
        %v1764 = vadd.f32 %v1763, %v1701
        %v1765 = vadd.f32 %v1764, %v1702
        %v1766 = vadd.f32 %v1765, %v1703
        %v1767 = vadd.f32 %v1766, %v1704
        %v1768 = vadd.f32 %v1767, %v1705
        %v1769 = vadd.f32 %v1768, %v1706
        %v1770 = vadd.f32 %v1769, %v1707
        %v1771 = vadd.f32 %v1770, %v1708
        %v1772 = vadd.f32 %v1771, %v1709
        %v1773 = vadd.f32 %v1772, %v1710
        %v1774 = vadd.f32 %v1773, %v1711
        %v1775 = vadd.f32 %v1774, %v1712
        %v1776 = vadd.f32 %v1775, %v1713
        %v1777 = vadd.f32 %v1776, %v1714
        %v1778 = vadd.f32 %v1777, %v1715
        %v1779 = vadd.f32 %v1778, %v1716
        %v1780 = vadd.f32 %v1779, %v1717
        %v1781 = vadd.f32 %v1780, %v1718
        %v1782 = vadd.f32 %v1781, %v1719
        %v1783 = vadd.f32 %v1782, %v1720
        %v1784 = vadd.f32 %v1783, %v1721
        %v1785 = vadd.f32 %v1784, %v1722
        %v1786 = vadd.f32 %v1785, %v1723
        %v1787 = vadd.f32 %v1786, %v1724
        %v1788 = vadd.f32 %v1787, %v1725
        %v1789 = vadd.f32 %v1788, %v1726
        %v1790 = vadd.f32 %v1789, %v1727
        %v1791 = vadd.f32 %v1790, %v1728
        %v1792 = vadd.f32 %v1791, %v1729
        %v1793 = vadd.f32 %v1792, %v1730
        %v1794 = vadd.f32 %v1793, %v1731
        %v1795 = vadd.f32 %v1794, %v1732
        %v1796 = vadd.f32 %v1795, %v1733
        %v1797 = vadd.f32 %v1796, %v1734
        %v1798 = vadd.f32 %v1797, %v1735
        %v1799 = vrot.slane %v1798, 4
        %v1800 = vadd.f32 %v1798, %v1799
        %v1801 = vrot.slane %v1800, 2
        %v1802 = vadd.f32 %v1800, %v1801
        %v1803 = vrot.slane %v1802, 1
        %v1804 = vadd.f32 %v1802, %v1803
        %1806 = vset.pattern.permute.xlu0 0
        %1807 = vperm.xlu0 %1806, %v902
        %v1808 = vpop.permute.xlu0 %1807
        %1811 = vset.pattern.permute.xlu0 0
        %1812 = vperm.xlu0 %1811, %v903
        %v1813 = vpop.permute.xlu0 %1812
        %1816 = vset.pattern.permute.xlu0 0
        %1817 = vperm.xlu0 %1816, %v904
        %v1818 = vpop.permute.xlu0 %1817
        %1821 = vset.pattern.permute.xlu0 0
        %1822 = vperm.xlu0 %1821, %v905
        %v1823 = vpop.permute.xlu0 %1822
        %1826 = vset.pattern.permute.xlu0 0
        %1827 = vperm.xlu0 %1826, %v906
        %v1828 = vpop.permute.xlu0 %1827
        %1831 = vset.pattern.permute.xlu0 0
        %1832 = vperm.xlu0 %1831, %v907
        %v1833 = vpop.permute.xlu0 %1832
        %1836 = vset.pattern.permute.xlu0 0
        %1837 = vperm.xlu0 %1836, %v908
        %v1838 = vpop.permute.xlu0 %1837
        %1841 = vset.pattern.permute.xlu0 0
        %1842 = vperm.xlu0 %1841, %v909
        %v1843 = vpop.permute.xlu0 %1842
        %1846 = vset.pattern.permute.xlu0 0
        %1847 = vperm.xlu0 %1846, %v910
        %v1848 = vpop.permute.xlu0 %1847
        %1851 = vset.pattern.permute.xlu0 0
        %1852 = vperm.xlu0 %1851, %v911
        %v1853 = vpop.permute.xlu0 %1852
        %1856 = vset.pattern.permute.xlu0 0
        %1857 = vperm.xlu0 %1856, %v912
        %v1858 = vpop.permute.xlu0 %1857
        %1861 = vset.pattern.permute.xlu0 0
        %1862 = vperm.xlu0 %1861, %v913
        %v1863 = vpop.permute.xlu0 %1862
        %1866 = vset.pattern.permute.xlu0 0
        %1867 = vperm.xlu0 %1866, %v914
        %v1868 = vpop.permute.xlu0 %1867
        %1871 = vset.pattern.permute.xlu0 0
        %1872 = vperm.xlu0 %1871, %v915
        %v1873 = vpop.permute.xlu0 %1872
        %1876 = vset.pattern.permute.xlu0 0
        %1877 = vperm.xlu0 %1876, %v916
        %v1878 = vpop.permute.xlu0 %1877
        %1881 = vset.pattern.permute.xlu0 0
        %1882 = vperm.xlu0 %1881, %v917
        %v1883 = vpop.permute.xlu0 %1882
        %1886 = vset.pattern.permute.xlu0 0
        %1887 = vperm.xlu0 %1886, %v918
        %v1888 = vpop.permute.xlu0 %1887
        %1891 = vset.pattern.permute.xlu0 0
        %1892 = vperm.xlu0 %1891, %v919
        %v1893 = vpop.permute.xlu0 %1892
        %1896 = vset.pattern.permute.xlu0 0
        %1897 = vperm.xlu0 %1896, %v920
        %v1898 = vpop.permute.xlu0 %1897
        %1901 = vset.pattern.permute.xlu0 0
        %1902 = vperm.xlu0 %1901, %v921
        %v1903 = vpop.permute.xlu0 %1902
        %1906 = vset.pattern.permute.xlu0 0
        %1907 = vperm.xlu0 %1906, %v922
        %v1908 = vpop.permute.xlu0 %1907
        %1911 = vset.pattern.permute.xlu0 0
        %1912 = vperm.xlu0 %1911, %v923
        %v1913 = vpop.permute.xlu0 %1912
        %1916 = vset.pattern.permute.xlu0 0
        %1917 = vperm.xlu0 %1916, %v924
        %v1918 = vpop.permute.xlu0 %1917
        %1921 = vset.pattern.permute.xlu0 0
        %1922 = vperm.xlu0 %1921, %v925
        %v1923 = vpop.permute.xlu0 %1922
        %1926 = vset.pattern.permute.xlu0 0
        %1927 = vperm.xlu0 %1926, %v926
        %v1928 = vpop.permute.xlu0 %1927
        %1931 = vset.pattern.permute.xlu0 0
        %1932 = vperm.xlu0 %1931, %v927
        %v1933 = vpop.permute.xlu0 %1932
        %1936 = vset.pattern.permute.xlu0 0
        %1937 = vperm.xlu0 %1936, %v928
        %v1938 = vpop.permute.xlu0 %1937
        %1941 = vset.pattern.permute.xlu0 0
        %1942 = vperm.xlu0 %1941, %v929
        %v1943 = vpop.permute.xlu0 %1942
        %1946 = vset.pattern.permute.xlu0 0
        %1947 = vperm.xlu0 %1946, %v930
        %v1948 = vpop.permute.xlu0 %1947
        %1951 = vset.pattern.permute.xlu0 0
        %1952 = vperm.xlu0 %1951, %v931
        %v1953 = vpop.permute.xlu0 %1952
        %1956 = vset.pattern.permute.xlu0 0
        %1957 = vperm.xlu0 %1956, %v932
        %v1958 = vpop.permute.xlu0 %1957
        %1961 = vset.pattern.permute.xlu0 0
        %1962 = vperm.xlu0 %1961, %v933
        %v1963 = vpop.permute.xlu0 %1962
        %1966 = vset.pattern.permute.xlu0 0
        %1967 = vperm.xlu0 %1966, %v934
        %v1968 = vpop.permute.xlu0 %1967
        %1971 = vset.pattern.permute.xlu0 0
        %1972 = vperm.xlu0 %1971, %v935
        %v1973 = vpop.permute.xlu0 %1972
        %1976 = vset.pattern.permute.xlu0 0
        %1977 = vperm.xlu0 %1976, %v936
        %v1978 = vpop.permute.xlu0 %1977
        %1981 = vset.pattern.permute.xlu0 0
        %1982 = vperm.xlu0 %1981, %v937
        %v1983 = vpop.permute.xlu0 %1982
        %1986 = vset.pattern.permute.xlu0 0
        %1987 = vperm.xlu0 %1986, %v938
        %v1988 = vpop.permute.xlu0 %1987
        %1991 = vset.pattern.permute.xlu0 0
        %1992 = vperm.xlu0 %1991, %v939
        %v1993 = vpop.permute.xlu0 %1992
        %1996 = vset.pattern.permute.xlu0 0
        %1997 = vperm.xlu0 %1996, %v940
        %v1998 = vpop.permute.xlu0 %1997
        %2001 = vset.pattern.permute.xlu0 0
        %2002 = vperm.xlu0 %2001, %v941
        %v2003 = vpop.permute.xlu0 %2002
        %2006 = vset.pattern.permute.xlu0 0
        %2007 = vperm.xlu0 %2006, %v942
        %v2008 = vpop.permute.xlu0 %2007
        %2011 = vset.pattern.permute.xlu0 0
        %2012 = vperm.xlu0 %2011, %v943
        %v2013 = vpop.permute.xlu0 %2012
        %2016 = vset.pattern.permute.xlu0 0
        %2017 = vperm.xlu0 %2016, %v944
        %v2018 = vpop.permute.xlu0 %2017
        %2021 = vset.pattern.permute.xlu0 0
        %2022 = vperm.xlu0 %2021, %v945
        %v2023 = vpop.permute.xlu0 %2022
        %2026 = vset.pattern.permute.xlu0 0
        %2027 = vperm.xlu0 %2026, %v946
        %v2028 = vpop.permute.xlu0 %2027
        %2031 = vset.pattern.permute.xlu0 0
        %2032 = vperm.xlu0 %2031, %v947
        %v2033 = vpop.permute.xlu0 %2032
        %2036 = vset.pattern.permute.xlu0 0
        %2037 = vperm.xlu0 %2036, %v948
        %v2038 = vpop.permute.xlu0 %2037
        %2041 = vset.pattern.permute.xlu0 0
        %2042 = vperm.xlu0 %2041, %v949
        %v2043 = vpop.permute.xlu0 %2042
        %2046 = vset.pattern.permute.xlu0 0
        %2047 = vperm.xlu0 %2046, %v950
        %v2048 = vpop.permute.xlu0 %2047
        %2051 = vset.pattern.permute.xlu0 0
        %2052 = vperm.xlu0 %2051, %v951
        %v2053 = vpop.permute.xlu0 %2052
        %2056 = vset.pattern.permute.xlu0 0
        %2057 = vperm.xlu0 %2056, %v952
        %v2058 = vpop.permute.xlu0 %2057
        %2061 = vset.pattern.permute.xlu0 0
        %2062 = vperm.xlu0 %2061, %v953
        %v2063 = vpop.permute.xlu0 %2062
        %2066 = vset.pattern.permute.xlu0 0
        %2067 = vperm.xlu0 %2066, %v954
        %v2068 = vpop.permute.xlu0 %2067
        %2071 = vset.pattern.permute.xlu0 0
        %2072 = vperm.xlu0 %2071, %v955
        %v2073 = vpop.permute.xlu0 %2072
        %2076 = vset.pattern.permute.xlu0 0
        %2077 = vperm.xlu0 %2076, %v956
        %v2078 = vpop.permute.xlu0 %2077
        %2081 = vset.pattern.permute.xlu0 0
        %2082 = vperm.xlu0 %2081, %v957
        %v2083 = vpop.permute.xlu0 %2082
        %2086 = vset.pattern.permute.xlu0 0
        %2087 = vperm.xlu0 %2086, %v958
        %v2088 = vpop.permute.xlu0 %2087
        %2091 = vset.pattern.permute.xlu0 0
        %2092 = vperm.xlu0 %2091, %v959
        %v2093 = vpop.permute.xlu0 %2092
        %2096 = vset.pattern.permute.xlu0 0
        %2097 = vperm.xlu0 %2096, %v960
        %v2098 = vpop.permute.xlu0 %2097
        %2101 = vset.pattern.permute.xlu0 0
        %2102 = vperm.xlu0 %2101, %v961
        %v2103 = vpop.permute.xlu0 %2102
        %2106 = vset.pattern.permute.xlu0 0
        %2107 = vperm.xlu0 %2106, %v962
        %v2108 = vpop.permute.xlu0 %2107
        %2111 = vset.pattern.permute.xlu0 0
        %2112 = vperm.xlu0 %2111, %v963
        %v2113 = vpop.permute.xlu0 %2112
        %2116 = vset.pattern.permute.xlu0 0
        %2117 = vperm.xlu0 %2116, %v964
        %v2118 = vpop.permute.xlu0 %2117
        %2121 = vset.pattern.permute.xlu0 0
        %2122 = vperm.xlu0 %2121, %v965
        %v2123 = vpop.permute.xlu0 %2122
        %v2125 = vsel %vm1224, %v1808, 0.0
        %v2126 = vsel %vm1225, %v1813, 0.0
        %v2127 = vsel %vm1226, %v1818, 0.0
        %v2128 = vsel %vm1227, %v1823, 0.0
        %v2129 = vsel %vm1228, %v1828, 0.0
        %v2130 = vsel %vm1229, %v1833, 0.0
        %v2131 = vsel %vm1230, %v1838, 0.0
        %v2132 = vsel %vm1231, %v1843, 0.0
        %v2133 = vsel %vm1232, %v1848, 0.0
        %v2134 = vsel %vm1233, %v1853, 0.0
        %v2135 = vsel %vm1234, %v1858, 0.0
        %v2136 = vsel %vm1235, %v1863, 0.0
        %v2137 = vsel %vm1236, %v1868, 0.0
        %v2138 = vsel %vm1237, %v1873, 0.0
        %v2139 = vsel %vm1238, %v1878, 0.0
        %v2140 = vsel %vm1239, %v1883, 0.0
        %v2141 = vsel %vm1240, %v1888, 0.0
        %v2142 = vsel %vm1241, %v1893, 0.0
        %v2143 = vsel %vm1242, %v1898, 0.0
        %v2144 = vsel %vm1243, %v1903, 0.0
        %v2145 = vsel %vm1244, %v1908, 0.0
        %v2146 = vsel %vm1245, %v1913, 0.0
        %v2147 = vsel %vm1246, %v1918, 0.0
        %v2148 = vsel %vm1247, %v1923, 0.0
        %v2149 = vsel %vm1248, %v1928, 0.0
        %v2150 = vsel %vm1249, %v1933, 0.0
        %v2151 = vsel %vm1250, %v1938, 0.0
        %v2152 = vsel %vm1251, %v1943, 0.0
        %v2153 = vsel %vm1252, %v1948, 0.0
        %v2154 = vsel %vm1253, %v1953, 0.0
        %v2155 = vsel %vm1254, %v1958, 0.0
        %v2156 = vsel %vm1255, %v1963, 0.0
        %v2157 = vsel %vm1256, %v1968, 0.0
        %v2158 = vsel %vm1257, %v1973, 0.0
        %v2159 = vsel %vm1258, %v1978, 0.0
        %v2160 = vsel %vm1259, %v1983, 0.0
        %v2161 = vsel %vm1260, %v1988, 0.0
        %v2162 = vsel %vm1261, %v1993, 0.0
        %v2163 = vsel %vm1262, %v1998, 0.0
        %v2164 = vsel %vm1263, %v2003, 0.0
        %v2165 = vsel %vm1264, %v2008, 0.0
        %v2166 = vsel %vm1265, %v2013, 0.0
        %v2167 = vsel %vm1266, %v2018, 0.0
        %v2168 = vsel %vm1267, %v2023, 0.0
        %v2169 = vsel %vm1268, %v2028, 0.0
        %v2170 = vsel %vm1269, %v2033, 0.0
        %v2171 = vsel %vm1270, %v2038, 0.0
        %v2172 = vsel %vm1271, %v2043, 0.0
        %v2173 = vsel %vm1272, %v2048, 0.0
        %v2174 = vsel %vm1273, %v2053, 0.0
        %v2175 = vsel %vm1274, %v2058, 0.0
        %v2176 = vsel %vm1275, %v2063, 0.0
        %v2177 = vsel %vm1276, %v2068, 0.0
        %v2178 = vsel %vm1277, %v2073, 0.0
        %v2179 = vsel %vm1278, %v2078, 0.0
        %v2180 = vsel %vm1279, %v2083, 0.0
        %v2181 = vsel %vm1280, %v2088, 0.0
        %v2182 = vsel %vm1281, %v2093, 0.0
        %v2183 = vsel %vm1282, %v2098, 0.0
        %v2184 = vsel %vm1283, %v2103, 0.0
        %v2185 = vsel %vm1284, %v2108, 0.0
        %v2186 = vsel %vm1285, %v2113, 0.0
        %v2187 = vsel %vm1286, %v2118, 0.0
        %v2188 = vsel %vm1287, %v2123, 0.0
        %v2189 = vadd.f32 %v2125, %v2126
        %v2190 = vadd.f32 %v2189, %v2127
        %v2191 = vadd.f32 %v2190, %v2128
        %v2192 = vadd.f32 %v2191, %v2129
        %v2193 = vadd.f32 %v2192, %v2130
        %v2194 = vadd.f32 %v2193, %v2131
        %v2195 = vadd.f32 %v2194, %v2132
        %v2196 = vadd.f32 %v2195, %v2133
        %v2197 = vadd.f32 %v2196, %v2134
        %v2198 = vadd.f32 %v2197, %v2135
        %v2199 = vadd.f32 %v2198, %v2136
        %v2200 = vadd.f32 %v2199, %v2137
        %v2201 = vadd.f32 %v2200, %v2138
        %v2202 = vadd.f32 %v2201, %v2139
        %v2203 = vadd.f32 %v2202, %v2140
        %v2204 = vadd.f32 %v2203, %v2141
        %v2205 = vadd.f32 %v2204, %v2142
        %v2206 = vadd.f32 %v2205, %v2143
        %v2207 = vadd.f32 %v2206, %v2144
        %v2208 = vadd.f32 %v2207, %v2145
        %v2209 = vadd.f32 %v2208, %v2146
        %v2210 = vadd.f32 %v2209, %v2147
        %v2211 = vadd.f32 %v2210, %v2148
        %v2212 = vadd.f32 %v2211, %v2149
        %v2213 = vadd.f32 %v2212, %v2150
        %v2214 = vadd.f32 %v2213, %v2151
        %v2215 = vadd.f32 %v2214, %v2152
        %v2216 = vadd.f32 %v2215, %v2153
        %v2217 = vadd.f32 %v2216, %v2154
        %v2218 = vadd.f32 %v2217, %v2155
        %v2219 = vadd.f32 %v2218, %v2156
        %v2220 = vadd.f32 %v2219, %v2157
        %v2221 = vadd.f32 %v2220, %v2158
        %v2222 = vadd.f32 %v2221, %v2159
        %v2223 = vadd.f32 %v2222, %v2160
        %v2224 = vadd.f32 %v2223, %v2161
        %v2225 = vadd.f32 %v2224, %v2162
        %v2226 = vadd.f32 %v2225, %v2163
        %v2227 = vadd.f32 %v2226, %v2164
        %v2228 = vadd.f32 %v2227, %v2165
        %v2229 = vadd.f32 %v2228, %v2166
        %v2230 = vadd.f32 %v2229, %v2167
        %v2231 = vadd.f32 %v2230, %v2168
        %v2232 = vadd.f32 %v2231, %v2169
        %v2233 = vadd.f32 %v2232, %v2170
        %v2234 = vadd.f32 %v2233, %v2171
        %v2235 = vadd.f32 %v2234, %v2172
        %v2236 = vadd.f32 %v2235, %v2173
        %v2237 = vadd.f32 %v2236, %v2174
        %v2238 = vadd.f32 %v2237, %v2175
        %v2239 = vadd.f32 %v2238, %v2176
        %v2240 = vadd.f32 %v2239, %v2177
        %v2241 = vadd.f32 %v2240, %v2178
        %v2242 = vadd.f32 %v2241, %v2179
        %v2243 = vadd.f32 %v2242, %v2180
        %v2244 = vadd.f32 %v2243, %v2181
        %v2245 = vadd.f32 %v2244, %v2182
        %v2246 = vadd.f32 %v2245, %v2183
        %v2247 = vadd.f32 %v2246, %v2184
        %v2248 = vadd.f32 %v2247, %v2185
        %v2249 = vadd.f32 %v2248, %v2186
        %v2250 = vadd.f32 %v2249, %v2187
        %v2251 = vadd.f32 %v2250, %v2188
        %v2252 = vrot.slane %v2251, 4
        %v2253 = vadd.f32 %v2251, %v2252
        %v2254 = vrot.slane %v2253, 2
        %v2255 = vadd.f32 %v2253, %v2254
        %v2256 = vrot.slane %v2255, 1
        %v2257 = vadd.f32 %v2255, %v2256
        %v2258 = vld [vmem:[%s332] sm:$0x3]
        %vm2259 = vcmask 1040384
        %v2260 = vsel %vm2259, %v1804, %v2257
        %v2261 = vadd.f32 %v2258, %v2260
        %2262 = vst [vmem:[%s332] sm:$0x3] %v2261
        %s2263 = smul.u32 %s24, 2
        %s2264 = sadd.s32 %s2263, %s25
        %s2265 = smul.u32 64, %s2264
        %p2266 = scmp.lt.s32.totalorder %s2265, 255
        %s2267 = scalar_select %p2266, %s2265, 255
        %s2268 = smul.addr %s2267, 8
        %s2269 = scalar_lea.vmem %s4, %s2268
        %s2270 = sand.u32 %s190, 1
        %s2271 = scalar_lea.sflag [#allocation3], %s2270
        %s2272 = sand.u32 %s190, 1
        %s2273 = smul.addr %s2272, 2
        %s2274 = scalar_lea.vmem [#allocation2], %s2273
        // Predicated region
        $region41: #{tpu_custom_call.1} parent=35 // pred_check
          %p2275 = pneg %p174
        $region42: #{tpu_custom_call.1} parent=35 // pred_check_branch
          %2277 = sbr.rel (%p2275) target = $region44
        $region43: #{tpu_custom_call.1} parent=35 // pred_region
          %s2278 = smul.u32 %s24, 2
          %s2279 = sadd.s32 %s2278, %s25
          %s2280 = smul.u32 64, %s2279
        $region44: #{tpu_custom_call.1} parent=35 // pred_fallthru
          _
        // Predicated region
        $region45: #{tpu_custom_call.1} parent=35 // pred_check
          %p2281 = pneg %p200
        $region46: #{tpu_custom_call.1} parent=35 // pred_check_branch
          %2283 = sbr.rel (%p2281) target = $region48
        $region47: #{tpu_custom_call.1} parent=35 // pred_region
          %s2285 = ssub.s32 32, 32
          %2286 = vsyncadd %s2271, %s2285
          %s2287 = smul.addr %s24, 32
          %s2288 = scalar_lea.hbm %s5, %s2287
          %s2290 = sshll.u32 %s2274, 4
          %s2291 = int_to_ptr.vmem [resolvable:$true] %s2290
          %2293 = dma.vmem_to_hbm [thread:$0]  %s2291, 32, %s2288, %s2271
        $region48: #{tpu_custom_call.1} parent=35 // pred_fallthru
          _
      $region36: #{tpu_custom_call.1} parent=5 // pred_fallthru
        _
      %p2294 = scmp.le.s32.totalorder 2, %s15
      // Predicated region
      $region49: #{tpu_custom_call.1} parent=5 // pred_check
        %p2295 = pneg %p2294
      $region50: #{tpu_custom_call.1} parent=5 // pred_check_branch
        %2297 = sbr.rel (%p2295) target = $region52
      $region51: #{tpu_custom_call.1} parent=5 // pred_region
        %s2298 = ssub.s32 %s15, 2
        // Predicated region
        $region53: #{tpu_custom_call.1} parent=51 // pred_check
          %p2299 = pneg %p180
        $region54: #{tpu_custom_call.1} parent=51 // pred_check_branch
          %2301 = sbr.rel (%p2299) target = $region56
        $region55: #{tpu_custom_call.1} parent=51 // pred_region
          %s2302 = smul.u32 %s26, 2
          %s2303 = sadd.s32 %s2302, %s27
          %s2304 = smul.u32 64, %s2303
          %p2305 = scmp.lt.s32.totalorder %s2304, 255
          %s2306 = scalar_select %p2305, %s2304, 255
          %s2307 = smul.addr %s2306, 8
          %s2308 = scalar_lea.vmem %s4, %s2307
        $region56: #{tpu_custom_call.1} parent=51 // pred_fallthru
          _
        // Predicated region
        $region57: #{tpu_custom_call.1} parent=51 // pred_check
          %p2309 = pneg %p206
        $region58: #{tpu_custom_call.1} parent=51 // pred_check_branch
          %2311 = sbr.rel (%p2309) target = $region60
        $region59: #{tpu_custom_call.1} parent=51 // pred_region
          %s2312 = sand.u32 %s191, 1
          %s2313 = scalar_lea.sflag [#allocation3], %s2312
          %s2314 = sand.u32 %s191, 1
          %s2315 = smul.addr %s2314, 2
          %s2316 = scalar_lea.vmem [#allocation2], %s2315
          %2317 = dma.done %s2313, 32
        $region60: #{tpu_custom_call.1} parent=51 // pred_fallthru
          _
      $region52: #{tpu_custom_call.1} parent=5 // pred_fallthru
        _
    $region6: #{tpu_custom_call.1} parent=1 // loop_footer
      %s19 = sadd.s32 1, %s15
    $region7: #{tpu_custom_call.1} parent=1 // loop_footer_branch
      %14 = sbr.rel target = $region3
    $region8: #{tpu_custom_call.1} parent=1 // loop_exit
      _
    %2318 = vsyncpa [#allocation3], 1
    %s2319 = scalar_lea.sflag [#allocation3], 1
    %2320 = vsyncpa %s2319, 1

</llo_original>
